<compile_context>
chip_gen: v7x
topology: tpu7x:2x2x1
jax: 0.10.0
libtpu: 0.0.40
codegen_flags: <defaults>
</compile_context>

<pallas_src>
import functools

import numpy as np

import jax
import jax.numpy as jnp
from jax import lax
from jax.experimental import pallas as pl
from jax.experimental.pallas import tpu as pltpu


# -------------------- hyperparameters (small, synthetic) --------------------
REF_ENC_FILTERS = [4, 4, 8]       # hp.ref_enc_filters
NUM_MELS = 16                     # hp.num_mels
TTS_EMBED_DIMS = 32               # hp.tts_embed_dims  -> GRU hidden = 16
K = len(REF_ENC_FILTERS)
BN_EPS = 1e-5


def _conv_out_len(L):
    return (L - 3 + 2) // 2 + 1


# ------------------------------ Pallas kernel --------------------------------
def _ref_encoder_kernel(n_batch, seq_t, hidden,
                        x_ref,
                        s1_ref, m1_ref, a1_ref, g1_ref, b1_ref,
                        s2_ref, m2_ref, a2_ref, g2_ref, b2_ref,
                        s3_ref, m3_ref, a3_ref, g3_ref, b3_ref,
                        wih_ref, whh_ref, bih_ref, bhh_ref,
                        out_ref):
    """Fused conv-stack + BN(batch stats) + ReLU + GRU final hidden.

    x_ref:   [N*Ty, n_mels]           activation slab, rows=(n,h), cols=(c,w)
    s*_ref:  [3, N*Ho, N*Hin]  bf16   per-kh 0/1 row selection (stride-2 + pad)
    m*_ref:  [Cin*Win, 3*Cout*Wo] bf16  concatenated per-kh column operators
    a*_ref:  [Cout*Wo, Cout*Wo] f32   within-channel column-block averaging
    g*/b*_ref: [1, Cout*Wo]    f32    BN gamma/beta expanded to column layout
    wih_ref: [3, D, H] bf16   whh_ref: [3, H, H] bf16   per-gate (r, z, n)
    bih_ref/bhh_ref: [3, 1, H] f32
    out_ref: [N, H]                   final hidden state
    """

    def conv_bn_relu(x, s_ref, m_ref, a_ref, g_ref, b_ref):
        cw = a_ref.shape[0]
        # conv as  sum_kh  S_kh @ (X @ M_cat)[:, kh-block]
        # (conv bias omitted: training-mode BN mean cancels it exactly)
        z = jnp.dot(x.astype(jnp.bfloat16), m_ref[...],
                    preferred_element_type=jnp.float32)           # [R_in, 3*CW]
        zb = z.astype(jnp.bfloat16)
        y = jnp.dot(s_ref[0], zb[:, 0:cw], preferred_element_type=jnp.float32)
        y = y + jnp.dot(s_ref[1], zb[:, cw:2 * cw],
                        preferred_element_type=jnp.float32)
        y = y + jnp.dot(s_ref[2], zb[:, 2 * cw:3 * cw],
                        preferred_element_type=jnp.float32)
        # single fused batch-stats matmul: row-mean commuted with the linear
        # averaging operator A -> one [2, CW] @ [CW, CW] dot (kept in f32).
        rows = y.shape[0]
        colsums = jnp.concatenate(
            [jnp.sum(y, axis=0, keepdims=True),
             jnp.sum(y * y, axis=0, keepdims=True)], axis=0)      # [2, CW]
        stats = jnp.dot(colsums, a_ref[...],
                        preferred_element_type=jnp.float32) * (1.0 / rows)
        mean = stats[0:1, :]
        var = stats[1:2, :] - mean * mean
        # folded BN affine + ReLU: one FMA-style pass, rsqrt on the EUP.
        scale = g_ref[...] * lax.rsqrt(var + BN_EPS)
        shift = b_ref[...] - mean * scale
        return jnp.maximum(y * scale + shift, 0.0)

    x1 = conv_bn_relu(x_ref[...], s1_ref, m1_ref, a1_ref, g1_ref, b1_ref)
    x2 = conv_bn_relu(x1, s2_ref, m2_ref, a2_ref, g2_ref, b2_ref)
    # last layer emits time-major rows: [T*N, Cout*Wo] == GRU input [T*N, D]
    x3 = conv_bn_relu(x2, s3_ref, m3_ref, a3_ref, g3_ref, b3_ref)

    # GRU (PyTorch gate order r, z, n), weights split per gate so every gate
    # slab is lane-aligned [., H].  Input projections hoisted out of the
    # recurrence; T-step loop fully unrolled (T is tiny and static).
    x3b = x3.astype(jnp.bfloat16)
    gi_r = jnp.dot(x3b, wih_ref[0], preferred_element_type=jnp.float32) + bih_ref[0]
    gi_z = jnp.dot(x3b, wih_ref[1], preferred_element_type=jnp.float32) + bih_ref[1]
    gi_n = jnp.dot(x3b, wih_ref[2], preferred_element_type=jnp.float32) + bih_ref[2]

    h = jnp.zeros((n_batch, hidden), jnp.float32)
    for t in range(seq_t):
        lo, hi = t * n_batch, (t + 1) * n_batch           # static sublane slice
        hb = h.astype(jnp.bfloat16)
        gh_r = jnp.dot(hb, whh_ref[0], preferred_element_type=jnp.float32) + bhh_ref[0]
        gh_z = jnp.dot(hb, whh_ref[1], preferred_element_type=jnp.float32) + bhh_ref[1]
        gh_n = jnp.dot(hb, whh_ref[2], preferred_element_type=jnp.float32) + bhh_ref[2]
        r = jax.nn.sigmoid(gi_r[lo:hi, :] + gh_r)
        zg = jax.nn.sigmoid(gi_z[lo:hi, :] + gh_z)
        ng = jnp.tanh(gi_n[lo:hi, :] + r * gh_n)
        h = (1.0 - zg) * ng + zg * h
    out_ref[...] = h


# ------------------- parameter preparation (done once) -----------------------
def _pos_matrix(l_in, l_out, k):
    """P[l_in, l_out] = 1 if l_in == 2*l_out + k - 1 (stride-2, pad-1), else 0."""
    p = np.zeros((l_in, l_out), np.float32)
    for lo in range(l_out):
        li = 2 * lo + k - 1
        if 0 <= li < l_in:
            p[li, lo] = 1.0
    return p


def _row_select(n_batch, h_in, h_out, kh, time_major_out):
    """S[(out_row), (n*h_in + h)] = 1 iff h == 2*ho + kh - 1 (same batch index)."""
    s = np.zeros((n_batch * h_out, n_batch * h_in), np.float32)
    for n in range(n_batch):
        for ho in range(h_out):
            h = 2 * ho + kh - 1
            if 0 <= h < h_in:
                r = ho * n_batch + n if time_major_out else n * h_out + ho
                s[r, n * h_in + h] = 1.0
    return s


def init_params(key):
    """Raw parameters mirroring the PyTorch module (conv bias intentionally
    omitted: under training-mode BatchNorm it is exactly cancelled)."""
    params = {"convs": []}
    filters = [1] + REF_ENC_FILTERS
    for i in range(K):
        cin, cout = filters[i], filters[i + 1]
        key, kw_, kg, kb = jax.random.split(key, 4)
        w = 0.1 * jax.random.normal(kw_, (cout, cin, 3, 3), jnp.float32)
        gamma = 1.0 + 0.1 * jax.random.normal(kg, (cout,), jnp.float32)
        beta = 0.1 * jax.random.normal(kb, (cout,), jnp.float32)
        params["convs"].append(dict(w=w, gamma=gamma, beta=beta))

    out_w = NUM_MELS
    for _ in range(K):
        out_w = _conv_out_len(out_w)
    D = REF_ENC_FILTERS[-1] * out_w
    H = TTS_EMBED_DIMS // 2
    k = 1.0 / np.sqrt(np.float32(H))
    key, k1, k2, k3, k4 = jax.random.split(key, 5)
    w_ih = jax.random.uniform(k1, (3 * H, D), jnp.float32, -k, k)
    w_hh = jax.random.uniform(k2, (3 * H, H), jnp.float32, -k, k)
    b_ih = jax.random.uniform(k3, (3 * H,), jnp.float32, -k, k)
    b_hh = jax.random.uniform(k4, (3 * H,), jnp.float32, -k, k)
    params["gru"] = dict(wih_t=w_ih.T, whh_t=w_hh.T, bih=b_ih, bhh=b_hh)
    return params


def prepare_kernel_params(params, n_batch, ty):
    """Fold conv weights into the matmul-form operators S / M_cat / A, expand
    BN gamma/beta into the (channel, width) column layout, split the GRU
    weights per gate, and pre-cast all MXU operands to bf16.  Runs once, off
    the hot path; the jitted forward is then a single pallas_call."""
    filters = [1] + REF_ENC_FILTERS
    h_in, w_in = ty, NUM_MELS
    convs = []
    for i, layer in enumerate(params["convs"]):
        cin, cout = filters[i], filters[i + 1]
        h_out, w_out = _conv_out_len(h_in), _conv_out_len(w_in)
        time_major = (i == K - 1)   # last layer emits time-major rows for the GRU
        s = np.stack([_row_select(n_batch, h_in, h_out, kh, time_major)
                      for kh in range(3)], axis=0)               # [3, N*Ho, N*Hin]
        p = np.stack([_pos_matrix(w_in, w_out, kw) for kw in range(3)], axis=0)
        # M[kh, c*Win + w, co*Wo + wo] = sum_kw P[kw, w, wo] * weight[co, c, kh, kw]
        m = jnp.einsum("kwv,ochk->hcwov", jnp.asarray(p), layer["w"])
        m = m.reshape(3, cin * w_in, cout * w_out)
        # fuse the 3 kh-operators along output columns -> one X @ M_cat matmul
        m_cat = jnp.concatenate([m[0], m[1], m[2]], axis=1)      # [Cin*Win, 3*Co*Wo]
        a = np.kron(np.eye(cout, dtype=np.float32),
                    np.full((w_out, w_out), 1.0 / w_out, np.float32))
        gf = jnp.repeat(layer["gamma"], w_out)[None, :]
        bf = jnp.repeat(layer["beta"], w_out)[None, :]
        convs.append(dict(s=jnp.asarray(s, jnp.bfloat16),        # 0/1 exact in bf16
                          m=m_cat.astype(jnp.bfloat16),
                          a=jnp.asarray(a), g=gf, b=bf))
        h_in, w_in = h_out, w_out

    g = params["gru"]
    H = g["whh_t"].shape[0]
    wih_t, whh_t = g["wih_t"], g["whh_t"]                        # [D,3H], [H,3H]
    wih_g = jnp.stack([wih_t[:, 0:H], wih_t[:, H:2 * H], wih_t[:, 2 * H:3 * H]], 0)
    whh_g = jnp.stack([whh_t[:, 0:H], whh_t[:, H:2 * H], whh_t[:, 2 * H:3 * H]], 0)
    bih_g = jnp.stack([g["bih"][0:H], g["bih"][H:2 * H], g["bih"][2 * H:3 * H]], 0)
    bhh_g = jnp.stack([g["bhh"][0:H], g["bhh"][H:2 * H], g["bhh"][2 * H:3 * H]], 0)
    return dict(convs=convs,
                wih_g=wih_g.astype(jnp.bfloat16),                # [3, D, H]
                whh_g=whh_g.astype(jnp.bfloat16),                # [3, H, H]
                bih_g=bih_g[:, None, :], bhh_g=bhh_g[:, None, :])  # [3, 1, H] f32


# ------------------------------ forward (1 call) ------------------------------
@jax.jit
def reference_encoder_forward(inputs, kp):
    """inputs: [N, Ty/r, n_mels*r]  ->  [N, tts_embed_dims // 2]."""
    n_batch = inputs.shape[0]
    hidden = kp["whh_g"].shape[-1]
    seq_t = kp["convs"][-1]["s"].shape[1] // n_batch

    # view(N, 1, -1, num_mels) as a 2D slab: rows=(n, h), cols=(c=0, w=mel)
    x0 = inputs.reshape(-1, NUM_MELS).astype(jnp.float32)

    operands = [x0]
    for L in kp["convs"]:
        operands += [L["s"], L["m"], L["a"], L["g"], L["b"]]
    operands += [kp["wih_g"], kp["whh_g"], kp["bih_g"], kp["bhh_g"]]

    # advisory cost estimate for the XLA scheduler
    flops = 0
    transc = 0
    for L in kp["convs"]:
        _, r_out, r_in = L["s"].shape
        cw_in, cw3 = L["m"].shape
        cw = cw3 // 3
        flops += 2 * r_in * cw_in * cw3                    # X @ M_cat
        flops += 3 * 2 * r_out * r_in * cw                 # S_kh applications
        flops += 2 * 2 * cw * cw + 10 * r_out * cw         # fused stats + BN/ReLU
        transc += cw
    _, d_in, hdim = kp["wih_g"].shape
    tn = kp["convs"][-1]["s"].shape[1]
    flops += 3 * 2 * tn * d_in * hdim                      # hoisted gate projections
    flops += seq_t * (3 * 2 * n_batch * hdim * hdim + 12 * n_batch * hdim)
    transc += seq_t * n_batch * 3 * hdim
    bytes_accessed = sum(int(x.size) * x.dtype.itemsize for x in operands)
    bytes_accessed += n_batch * hidden * 4

    vmem = pl.BlockSpec(memory_space=pltpu.MemorySpace.VMEM)
    return pl.pallas_call(
        functools.partial(_ref_encoder_kernel, n_batch, seq_t, hidden),
        out_shape=jax.ShapeDtypeStruct((n_batch, hidden), jnp.float32),
        in_specs=[vmem] * len(operands),
        out_specs=vmem,
        cost_estimate=pl.CostEstimate(flops=int(flops),
                                      transcendentals=int(transc),
                                      bytes_accessed=int(bytes_accessed)),
    )(*operands)


# ----------------------- pure-JAX reference (checking) ------------------------
def _reference_forward_jax(inputs, params):
    n = inputs.shape[0]
    x = inputs.reshape(n, 1, -1, NUM_MELS).astype(jnp.float32)     # NCHW
    for layer in params["convs"]:
        x = lax.conv_general_dilated(
            x, layer["w"], window_strides=(2, 2), padding=((1, 1), (1, 1)),
            dimension_numbers=("NCHW", "OIHW", "NCHW"),
            precision=lax.Precision.HIGHEST)
        mean = jnp.mean(x, axis=(0, 2, 3), keepdims=True)
        var = jnp.mean((x - mean) ** 2, axis=(0, 2, 3), keepdims=True)
        x = (x - mean) * lax.rsqrt(var + BN_EPS)
        x = x * layer["gamma"][None, :, None, None] + layer["beta"][None, :, None, None]
        x = jnp.maximum(x, 0.0)
    x = jnp.transpose(x, (0, 2, 1, 3)).reshape(n, x.shape[2], -1)  # [N, T, C*W']
    g = params["gru"]
    H = g["whh_t"].shape[0]
    h = jnp.zeros((n, H), jnp.float32)
    for t in range(x.shape[1]):
        xt = x[:, t, :]
        gi = xt @ g["wih_t"] + g["bih"]
        gh = h @ g["whh_t"] + g["bhh"]
        r = jax.nn.sigmoid(gi[:, :H] + gh[:, :H])
        z = jax.nn.sigmoid(gi[:, H:2 * H] + gh[:, H:2 * H])
        ng = jnp.tanh(gi[:, 2 * H:] + r * gh[:, 2 * H:])
        h = (1.0 - z) * ng + z * h
    return h


# ---------------------------------- main --------------------------------------
if __name__ == "__main__":
    key = jax.random.PRNGKey(0)
    key, k_in, k_p = jax.random.split(key, 3)

    N, TY = 2, 16
    # inputs [N, Ty/r, n_mels*r]; r folds away in the view — use [N, Ty, n_mels]
    inputs = jax.random.normal(k_in, (N, TY, NUM_MELS), jnp.float32)
    params = init_params(k_p)
    kparams = prepare_kernel_params(params, N, TY)

    out = reference_encoder_forward(inputs, kparams)
    out = jax.block_until_ready(out)

    expected = (N, TTS_EMBED_DIMS // 2)
    assert out.shape == expected, (out.shape, expected)
    assert bool(jnp.all(jnp.isfinite(out)))

    # tolerance covers the bf16 MXU-operand cast (elementwise math stays f32)
    ref = _reference_forward_jax(inputs, params)
    assert bool(jnp.allclose(out, ref, atol=5e-2, rtol=5e-2)), \
        float(jnp.max(jnp.abs(out - ref)))
    print("KERNEL_OK")
</pallas_src>

<mosaic_0001>
module attributes {stable_mosaic.version = 11 : i64} {
  func.func @_ref_encoder_kernel(%arg0: memref<32x16xf32, #tpu.memory_space<vmem>>, %arg1: memref<3x16x32xbf16, #tpu.memory_space<vmem>>, %arg2: memref<16x96xbf16, #tpu.memory_space<vmem>>, %arg3: memref<32x32xf32, #tpu.memory_space<vmem>>, %arg4: memref<1x32xf32, #tpu.memory_space<vmem>>, %arg5: memref<1x32xf32, #tpu.memory_space<vmem>>, %arg6: memref<3x8x16xbf16, #tpu.memory_space<vmem>>, %arg7: memref<32x48xbf16, #tpu.memory_space<vmem>>, %arg8: memref<16x16xf32, #tpu.memory_space<vmem>>, %arg9: memref<1x16xf32, #tpu.memory_space<vmem>>, %arg10: memref<1x16xf32, #tpu.memory_space<vmem>>, %arg11: memref<3x4x8xbf16, #tpu.memory_space<vmem>>, %arg12: memref<16x48xbf16, #tpu.memory_space<vmem>>, %arg13: memref<16x16xf32, #tpu.memory_space<vmem>>, %arg14: memref<1x16xf32, #tpu.memory_space<vmem>>, %arg15: memref<1x16xf32, #tpu.memory_space<vmem>>, %arg16: memref<3x16x16xbf16, #tpu.memory_space<vmem>>, %arg17: memref<3x16x16xbf16, #tpu.memory_space<vmem>>, %arg18: memref<3x1x16xf32, #tpu.memory_space<vmem>>, %arg19: memref<3x1x16xf32, #tpu.memory_space<vmem>>, %arg20: memref<2x16xf32, #tpu.memory_space<vmem>>) attributes {dimension_semantics = [], scalar_prefetch = 0 : i64, scratch_operands = 0 : i64, tpu.core_type = #tpu.core_type<tc>} {
    %c0 = arith.constant 0 : index
    %c0_0 = arith.constant 0 : index
    %0 = vector.load %arg0[%c0, %c0_0] : memref<32x16xf32, #tpu.memory_space<vmem>>, vector<32x16xf32>
    %1 = arith.truncf %0 : vector<32x16xf32> to vector<32x16xbf16>
    %c0_1 = arith.constant 0 : index
    %c0_2 = arith.constant 0 : index
    %2 = vector.load %arg2[%c0_1, %c0_2] : memref<16x96xbf16, #tpu.memory_space<vmem>>, vector<16x96xbf16>
    %cst = arith.constant dense<0.000000e+00> : vector<32x96xf32>
    %3 = tpu.matmul %1, %2, %cst {dimension_numbers = #tpu.dot_dimension_numbers<[1], [0], [0], [1], [0, 0, 1, 1], [], []>} : vector<32x16xbf16>, vector<16x96xbf16>, vector<32x96xf32> -> vector<32x96xf32>
    %4 = arith.truncf %3 : vector<32x96xf32> to vector<32x96xbf16>
    %c0_3 = arith.constant 0 : index
    %c0_4 = arith.constant 0 : index
    %c0_5 = arith.constant 0 : index
    %5 = vector.load %arg1[%c0_3, %c0_4, %c0_5] : memref<3x16x32xbf16, #tpu.memory_space<vmem>>, vector<1x16x32xbf16>
    %6 = vector.shape_cast %5 : vector<1x16x32xbf16> to vector<16x32xbf16>
    %7 = vector.extract_strided_slice %4 {offsets = [0, 0], sizes = [32, 32], strides = [1, 1]} : vector<32x96xbf16> to vector<32x32xbf16>
    %cst_6 = arith.constant dense<0.000000e+00> : vector<16x32xf32>
    %8 = tpu.matmul %6, %7, %cst_6 {dimension_numbers = #tpu.dot_dimension_numbers<[1], [0], [0], [1], [0, 0, 1, 1], [], []>} : vector<16x32xbf16>, vector<32x32xbf16>, vector<16x32xf32> -> vector<16x32xf32>
    %c1 = arith.constant 1 : index
    %c0_7 = arith.constant 0 : index
    %c0_8 = arith.constant 0 : index
    %9 = vector.load %arg1[%c1, %c0_7, %c0_8] : memref<3x16x32xbf16, #tpu.memory_space<vmem>>, vector<1x16x32xbf16>
    %10 = vector.shape_cast %9 : vector<1x16x32xbf16> to vector<16x32xbf16>
    %11 = vector.extract_strided_slice %4 {offsets = [0, 32], sizes = [32, 32], strides = [1, 1]} : vector<32x96xbf16> to vector<32x32xbf16>
    %cst_9 = arith.constant dense<0.000000e+00> : vector<16x32xf32>
    %12 = tpu.matmul %10, %11, %cst_9 {dimension_numbers = #tpu.dot_dimension_numbers<[1], [0], [0], [1], [0, 0, 1, 1], [], []>} : vector<16x32xbf16>, vector<32x32xbf16>, vector<16x32xf32> -> vector<16x32xf32>
    %13 = arith.addf %8, %12 : vector<16x32xf32>
    %c2 = arith.constant 2 : index
    %c0_10 = arith.constant 0 : index
    %c0_11 = arith.constant 0 : index
    %14 = vector.load %arg1[%c2, %c0_10, %c0_11] : memref<3x16x32xbf16, #tpu.memory_space<vmem>>, vector<1x16x32xbf16>
    %15 = vector.shape_cast %14 : vector<1x16x32xbf16> to vector<16x32xbf16>
    %16 = vector.extract_strided_slice %4 {offsets = [0, 64], sizes = [32, 32], strides = [1, 1]} : vector<32x96xbf16> to vector<32x32xbf16>
    %cst_12 = arith.constant dense<0.000000e+00> : vector<16x32xf32>
    %17 = tpu.matmul %15, %16, %cst_12 {dimension_numbers = #tpu.dot_dimension_numbers<[1], [0], [0], [1], [0, 0, 1, 1], [], []>} : vector<16x32xbf16>, vector<32x32xbf16>, vector<16x32xf32> -> vector<16x32xf32>
    %18 = arith.addf %13, %17 : vector<16x32xf32>
    %cst_13 = arith.constant dense<0.000000e+00> : vector<32xf32>
    %19 = vector.multi_reduction <add>, %18, %cst_13 [0] : vector<16x32xf32> to vector<32xf32>
    %20 = vector.shape_cast %19 : vector<32xf32> to vector<1x32xf32>
    %21 = arith.mulf %18, %18 : vector<16x32xf32>
    %cst_14 = arith.constant dense<0.000000e+00> : vector<32xf32>
    %22 = vector.multi_reduction <add>, %21, %cst_14 [0] : vector<16x32xf32> to vector<32xf32>
    %23 = vector.shape_cast %22 : vector<32xf32> to vector<1x32xf32>
    %24 = tpu.concatenate %20, %23 in 0 : vector<1x32xf32>, vector<1x32xf32> -> vector<2x32xf32>
    %c0_15 = arith.constant 0 : index
    %c0_16 = arith.constant 0 : index
    %25 = vector.load %arg3[%c0_15, %c0_16] : memref<32x32xf32, #tpu.memory_space<vmem>>, vector<32x32xf32>
    %cst_17 = arith.constant dense<0.000000e+00> : vector<2x32xf32>
    %26 = tpu.matmul %24, %25, %cst_17 {dimension_numbers = #tpu.dot_dimension_numbers<[1], [0], [0], [1], [0, 0, 1, 1], [], []>} : vector<2x32xf32>, vector<32x32xf32>, vector<2x32xf32> -> vector<2x32xf32>
    %cst_18 = arith.constant 6.250000e-02 : f32
    %27 = vector.broadcast %cst_18 : f32 to vector<2x32xf32>
    %28 = arith.mulf %26, %27 : vector<2x32xf32>
    %29 = vector.extract_strided_slice %28 {offsets = [0, 0], sizes = [1, 32], strides = [1, 1]} : vector<2x32xf32> to vector<1x32xf32>
    %30 = vector.extract_strided_slice %28 {offsets = [1, 0], sizes = [1, 32], strides = [1, 1]} : vector<2x32xf32> to vector<1x32xf32>
    %31 = arith.mulf %29, %29 : vector<1x32xf32>
    %32 = arith.subf %30, %31 : vector<1x32xf32>
    %c0_19 = arith.constant 0 : index
    %c0_20 = arith.constant 0 : index
    %33 = vector.load %arg4[%c0_19, %c0_20] : memref<1x32xf32, #tpu.memory_space<vmem>>, vector<1x32xf32>
    %cst_21 = arith.constant 9.99999974E-6 : f32
    %34 = vector.broadcast %cst_21 : f32 to vector<1x32xf32>
    %35 = arith.addf %32, %34 : vector<1x32xf32>
    %36 = math.rsqrt %35 : vector<1x32xf32>
    %37 = arith.mulf %33, %36 : vector<1x32xf32>
    %c0_22 = arith.constant 0 : index
    %c0_23 = arith.constant 0 : index
    %38 = vector.load %arg5[%c0_22, %c0_23] : memref<1x32xf32, #tpu.memory_space<vmem>>, vector<1x32xf32>
    %39 = arith.mulf %29, %37 : vector<1x32xf32>
    %40 = arith.subf %38, %39 : vector<1x32xf32>
    %41 = vector.broadcast %37 : vector<1x32xf32> to vector<16x32xf32>
    %42 = arith.mulf %18, %41 : vector<16x32xf32>
    %43 = vector.broadcast %40 : vector<1x32xf32> to vector<16x32xf32>
    %44 = arith.addf %42, %43 : vector<16x32xf32>
    %cst_24 = arith.constant 0.000000e+00 : f32
    %45 = vector.broadcast %cst_24 : f32 to vector<16x32xf32>
    %46 = arith.maximumf %44, %45 : vector<16x32xf32>
    %47 = arith.truncf %46 : vector<16x32xf32> to vector<16x32xbf16>
    %c0_25 = arith.constant 0 : index
    %c0_26 = arith.constant 0 : index
    %48 = vector.load %arg7[%c0_25, %c0_26] : memref<32x48xbf16, #tpu.memory_space<vmem>>, vector<32x48xbf16>
    %cst_27 = arith.constant dense<0.000000e+00> : vector<16x48xf32>
    %49 = tpu.matmul %47, %48, %cst_27 {dimension_numbers = #tpu.dot_dimension_numbers<[1], [0], [0], [1], [0, 0, 1, 1], [], []>} : vector<16x32xbf16>, vector<32x48xbf16>, vector<16x48xf32> -> vector<16x48xf32>
    %50 = arith.truncf %49 : vector<16x48xf32> to vector<16x48xbf16>
    %c0_28 = arith.constant 0 : index
    %c0_29 = arith.constant 0 : index
    %c0_30 = arith.constant 0 : index
    %51 = vector.load %arg6[%c0_28, %c0_29, %c0_30] : memref<3x8x16xbf16, #tpu.memory_space<vmem>>, vector<1x8x16xbf16>
    %52 = vector.shape_cast %51 : vector<1x8x16xbf16> to vector<8x16xbf16>
    %53 = vector.extract_strided_slice %50 {offsets = [0, 0], sizes = [16, 16], strides = [1, 1]} : vector<16x48xbf16> to vector<16x16xbf16>
    %cst_31 = arith.constant dense<0.000000e+00> : vector<8x16xf32>
    %54 = tpu.matmul %52, %53, %cst_31 {dimension_numbers = #tpu.dot_dimension_numbers<[1], [0], [0], [1], [0, 0, 1, 1], [], []>} : vector<8x16xbf16>, vector<16x16xbf16>, vector<8x16xf32> -> vector<8x16xf32>
    %c1_32 = arith.constant 1 : index
    %c0_33 = arith.constant 0 : index
    %c0_34 = arith.constant 0 : index
    %55 = vector.load %arg6[%c1_32, %c0_33, %c0_34] : memref<3x8x16xbf16, #tpu.memory_space<vmem>>, vector<1x8x16xbf16>
    %56 = vector.shape_cast %55 : vector<1x8x16xbf16> to vector<8x16xbf16>
    %57 = vector.extract_strided_slice %50 {offsets = [0, 16], sizes = [16, 16], strides = [1, 1]} : vector<16x48xbf16> to vector<16x16xbf16>
    %cst_35 = arith.constant dense<0.000000e+00> : vector<8x16xf32>
    %58 = tpu.matmul %56, %57, %cst_35 {dimension_numbers = #tpu.dot_dimension_numbers<[1], [0], [0], [1], [0, 0, 1, 1], [], []>} : vector<8x16xbf16>, vector<16x16xbf16>, vector<8x16xf32> -> vector<8x16xf32>
    %59 = arith.addf %54, %58 : vector<8x16xf32>
    %c2_36 = arith.constant 2 : index
    %c0_37 = arith.constant 0 : index
    %c0_38 = arith.constant 0 : index
    %60 = vector.load %arg6[%c2_36, %c0_37, %c0_38] : memref<3x8x16xbf16, #tpu.memory_space<vmem>>, vector<1x8x16xbf16>
    %61 = vector.shape_cast %60 : vector<1x8x16xbf16> to vector<8x16xbf16>
    %62 = vector.extract_strided_slice %50 {offsets = [0, 32], sizes = [16, 16], strides = [1, 1]} : vector<16x48xbf16> to vector<16x16xbf16>
    %cst_39 = arith.constant dense<0.000000e+00> : vector<8x16xf32>
    %63 = tpu.matmul %61, %62, %cst_39 {dimension_numbers = #tpu.dot_dimension_numbers<[1], [0], [0], [1], [0, 0, 1, 1], [], []>} : vector<8x16xbf16>, vector<16x16xbf16>, vector<8x16xf32> -> vector<8x16xf32>
    %64 = arith.addf %59, %63 : vector<8x16xf32>
    %cst_40 = arith.constant dense<0.000000e+00> : vector<16xf32>
    %65 = vector.multi_reduction <add>, %64, %cst_40 [0] : vector<8x16xf32> to vector<16xf32>
    %66 = vector.shape_cast %65 : vector<16xf32> to vector<1x16xf32>
    %67 = arith.mulf %64, %64 : vector<8x16xf32>
    %cst_41 = arith.constant dense<0.000000e+00> : vector<16xf32>
    %68 = vector.multi_reduction <add>, %67, %cst_41 [0] : vector<8x16xf32> to vector<16xf32>
    %69 = vector.shape_cast %68 : vector<16xf32> to vector<1x16xf32>
    %70 = tpu.concatenate %66, %69 in 0 : vector<1x16xf32>, vector<1x16xf32> -> vector<2x16xf32>
    %c0_42 = arith.constant 0 : index
    %c0_43 = arith.constant 0 : index
    %71 = vector.load %arg8[%c0_42, %c0_43] : memref<16x16xf32, #tpu.memory_space<vmem>>, vector<16x16xf32>
    %cst_44 = arith.constant dense<0.000000e+00> : vector<2x16xf32>
    %72 = tpu.matmul %70, %71, %cst_44 {dimension_numbers = #tpu.dot_dimension_numbers<[1], [0], [0], [1], [0, 0, 1, 1], [], []>} : vector<2x16xf32>, vector<16x16xf32>, vector<2x16xf32> -> vector<2x16xf32>
    %cst_45 = arith.constant 1.250000e-01 : f32
    %73 = vector.broadcast %cst_45 : f32 to vector<2x16xf32>
    %74 = arith.mulf %72, %73 : vector<2x16xf32>
    %75 = vector.extract_strided_slice %74 {offsets = [0, 0], sizes = [1, 16], strides = [1, 1]} : vector<2x16xf32> to vector<1x16xf32>
    %76 = vector.extract_strided_slice %74 {offsets = [1, 0], sizes = [1, 16], strides = [1, 1]} : vector<2x16xf32> to vector<1x16xf32>
    %77 = arith.mulf %75, %75 : vector<1x16xf32>
    %78 = arith.subf %76, %77 : vector<1x16xf32>
    %c0_46 = arith.constant 0 : index
    %c0_47 = arith.constant 0 : index
    %79 = vector.load %arg9[%c0_46, %c0_47] : memref<1x16xf32, #tpu.memory_space<vmem>>, vector<1x16xf32>
    %cst_48 = arith.constant 9.99999974E-6 : f32
    %80 = vector.broadcast %cst_48 : f32 to vector<1x16xf32>
    %81 = arith.addf %78, %80 : vector<1x16xf32>
    %82 = math.rsqrt %81 : vector<1x16xf32>
    %83 = arith.mulf %79, %82 : vector<1x16xf32>
    %c0_49 = arith.constant 0 : index
    %c0_50 = arith.constant 0 : index
    %84 = vector.load %arg10[%c0_49, %c0_50] : memref<1x16xf32, #tpu.memory_space<vmem>>, vector<1x16xf32>
    %85 = arith.mulf %75, %83 : vector<1x16xf32>
    %86 = arith.subf %84, %85 : vector<1x16xf32>
    %87 = vector.broadcast %83 : vector<1x16xf32> to vector<8x16xf32>
    %88 = arith.mulf %64, %87 : vector<8x16xf32>
    %89 = vector.broadcast %86 : vector<1x16xf32> to vector<8x16xf32>
    %90 = arith.addf %88, %89 : vector<8x16xf32>
    %cst_51 = arith.constant 0.000000e+00 : f32
    %91 = vector.broadcast %cst_51 : f32 to vector<8x16xf32>
    %92 = arith.maximumf %90, %91 : vector<8x16xf32>
    %93 = arith.truncf %92 : vector<8x16xf32> to vector<8x16xbf16>
    %c0_52 = arith.constant 0 : index
    %c0_53 = arith.constant 0 : index
    %94 = vector.load %arg12[%c0_52, %c0_53] : memref<16x48xbf16, #tpu.memory_space<vmem>>, vector<16x48xbf16>
    %cst_54 = arith.constant dense<0.000000e+00> : vector<8x48xf32>
    %95 = tpu.matmul %93, %94, %cst_54 {dimension_numbers = #tpu.dot_dimension_numbers<[1], [0], [0], [1], [0, 0, 1, 1], [], []>} : vector<8x16xbf16>, vector<16x48xbf16>, vector<8x48xf32> -> vector<8x48xf32>
    %96 = arith.truncf %95 : vector<8x48xf32> to vector<8x48xbf16>
    %c0_55 = arith.constant 0 : index
    %c0_56 = arith.constant 0 : index
    %c0_57 = arith.constant 0 : index
    %97 = vector.load %arg11[%c0_55, %c0_56, %c0_57] : memref<3x4x8xbf16, #tpu.memory_space<vmem>>, vector<1x4x8xbf16>
    %98 = vector.shape_cast %97 : vector<1x4x8xbf16> to vector<4x8xbf16>
    %99 = vector.extract_strided_slice %96 {offsets = [0, 0], sizes = [8, 16], strides = [1, 1]} : vector<8x48xbf16> to vector<8x16xbf16>
    %cst_58 = arith.constant dense<0.000000e+00> : vector<4x16xf32>
    %100 = tpu.matmul %98, %99, %cst_58 {dimension_numbers = #tpu.dot_dimension_numbers<[1], [0], [0], [1], [0, 0, 1, 1], [], []>} : vector<4x8xbf16>, vector<8x16xbf16>, vector<4x16xf32> -> vector<4x16xf32>
    %c1_59 = arith.constant 1 : index
    %c0_60 = arith.constant 0 : index
    %c0_61 = arith.constant 0 : index
    %101 = vector.load %arg11[%c1_59, %c0_60, %c0_61] : memref<3x4x8xbf16, #tpu.memory_space<vmem>>, vector<1x4x8xbf16>
    %102 = vector.shape_cast %101 : vector<1x4x8xbf16> to vector<4x8xbf16>
    %103 = vector.extract_strided_slice %96 {offsets = [0, 16], sizes = [8, 16], strides = [1, 1]} : vector<8x48xbf16> to vector<8x16xbf16>
    %cst_62 = arith.constant dense<0.000000e+00> : vector<4x16xf32>
    %104 = tpu.matmul %102, %103, %cst_62 {dimension_numbers = #tpu.dot_dimension_numbers<[1], [0], [0], [1], [0, 0, 1, 1], [], []>} : vector<4x8xbf16>, vector<8x16xbf16>, vector<4x16xf32> -> vector<4x16xf32>
    %105 = arith.addf %100, %104 : vector<4x16xf32>
    %c2_63 = arith.constant 2 : index
    %c0_64 = arith.constant 0 : index
    %c0_65 = arith.constant 0 : index
    %106 = vector.load %arg11[%c2_63, %c0_64, %c0_65] : memref<3x4x8xbf16, #tpu.memory_space<vmem>>, vector<1x4x8xbf16>
    %107 = vector.shape_cast %106 : vector<1x4x8xbf16> to vector<4x8xbf16>
    %108 = vector.extract_strided_slice %96 {offsets = [0, 32], sizes = [8, 16], strides = [1, 1]} : vector<8x48xbf16> to vector<8x16xbf16>
    %cst_66 = arith.constant dense<0.000000e+00> : vector<4x16xf32>
    %109 = tpu.matmul %107, %108, %cst_66 {dimension_numbers = #tpu.dot_dimension_numbers<[1], [0], [0], [1], [0, 0, 1, 1], [], []>} : vector<4x8xbf16>, vector<8x16xbf16>, vector<4x16xf32> -> vector<4x16xf32>
    %110 = arith.addf %105, %109 : vector<4x16xf32>
    %cst_67 = arith.constant dense<0.000000e+00> : vector<16xf32>
    %111 = vector.multi_reduction <add>, %110, %cst_67 [0] : vector<4x16xf32> to vector<16xf32>
    %112 = vector.shape_cast %111 : vector<16xf32> to vector<1x16xf32>
    %113 = arith.mulf %110, %110 : vector<4x16xf32>
    %cst_68 = arith.constant dense<0.000000e+00> : vector<16xf32>
    %114 = vector.multi_reduction <add>, %113, %cst_68 [0] : vector<4x16xf32> to vector<16xf32>
    %115 = vector.shape_cast %114 : vector<16xf32> to vector<1x16xf32>
    %116 = tpu.concatenate %112, %115 in 0 : vector<1x16xf32>, vector<1x16xf32> -> vector<2x16xf32>
    %c0_69 = arith.constant 0 : index
    %c0_70 = arith.constant 0 : index
    %117 = vector.load %arg13[%c0_69, %c0_70] : memref<16x16xf32, #tpu.memory_space<vmem>>, vector<16x16xf32>
    %cst_71 = arith.constant dense<0.000000e+00> : vector<2x16xf32>
    %118 = tpu.matmul %116, %117, %cst_71 {dimension_numbers = #tpu.dot_dimension_numbers<[1], [0], [0], [1], [0, 0, 1, 1], [], []>} : vector<2x16xf32>, vector<16x16xf32>, vector<2x16xf32> -> vector<2x16xf32>
    %cst_72 = arith.constant 2.500000e-01 : f32
    %119 = vector.broadcast %cst_72 : f32 to vector<2x16xf32>
    %120 = arith.mulf %118, %119 : vector<2x16xf32>
    %121 = vector.extract_strided_slice %120 {offsets = [0, 0], sizes = [1, 16], strides = [1, 1]} : vector<2x16xf32> to vector<1x16xf32>
    %122 = vector.extract_strided_slice %120 {offsets = [1, 0], sizes = [1, 16], strides = [1, 1]} : vector<2x16xf32> to vector<1x16xf32>
    %123 = arith.mulf %121, %121 : vector<1x16xf32>
    %124 = arith.subf %122, %123 : vector<1x16xf32>
    %c0_73 = arith.constant 0 : index
    %c0_74 = arith.constant 0 : index
    %125 = vector.load %arg14[%c0_73, %c0_74] : memref<1x16xf32, #tpu.memory_space<vmem>>, vector<1x16xf32>
    %cst_75 = arith.constant 9.99999974E-6 : f32
    %126 = vector.broadcast %cst_75 : f32 to vector<1x16xf32>
    %127 = arith.addf %124, %126 : vector<1x16xf32>
    %128 = math.rsqrt %127 : vector<1x16xf32>
    %129 = arith.mulf %125, %128 : vector<1x16xf32>
    %c0_76 = arith.constant 0 : index
    %c0_77 = arith.constant 0 : index
    %130 = vector.load %arg15[%c0_76, %c0_77] : memref<1x16xf32, #tpu.memory_space<vmem>>, vector<1x16xf32>
    %131 = arith.mulf %121, %129 : vector<1x16xf32>
    %132 = arith.subf %130, %131 : vector<1x16xf32>
    %133 = vector.broadcast %129 : vector<1x16xf32> to vector<4x16xf32>
    %134 = arith.mulf %110, %133 : vector<4x16xf32>
    %135 = vector.broadcast %132 : vector<1x16xf32> to vector<4x16xf32>
    %136 = arith.addf %134, %135 : vector<4x16xf32>
    %cst_78 = arith.constant 0.000000e+00 : f32
    %137 = vector.broadcast %cst_78 : f32 to vector<4x16xf32>
    %138 = arith.maximumf %136, %137 : vector<4x16xf32>
    %139 = arith.truncf %138 : vector<4x16xf32> to vector<4x16xbf16>
    %c0_79 = arith.constant 0 : index
    %c0_80 = arith.constant 0 : index
    %c0_81 = arith.constant 0 : index
    %140 = vector.load %arg16[%c0_79, %c0_80, %c0_81] : memref<3x16x16xbf16, #tpu.memory_space<vmem>>, vector<1x16x16xbf16>
    %141 = vector.shape_cast %140 : vector<1x16x16xbf16> to vector<16x16xbf16>
    %cst_82 = arith.constant dense<0.000000e+00> : vector<4x16xf32>
    %142 = tpu.matmul %139, %141, %cst_82 {dimension_numbers = #tpu.dot_dimension_numbers<[1], [0], [0], [1], [0, 0, 1, 1], [], []>} : vector<4x16xbf16>, vector<16x16xbf16>, vector<4x16xf32> -> vector<4x16xf32>
    %c0_83 = arith.constant 0 : index
    %c0_84 = arith.constant 0 : index
    %c0_85 = arith.constant 0 : index
    %143 = vector.load %arg18[%c0_83, %c0_84, %c0_85] : memref<3x1x16xf32, #tpu.memory_space<vmem>>, vector<1x1x16xf32>
    %144 = vector.shape_cast %143 : vector<1x1x16xf32> to vector<1x16xf32>
    %145 = vector.broadcast %144 : vector<1x16xf32> to vector<4x16xf32>
    %146 = arith.addf %142, %145 : vector<4x16xf32>
    %c1_86 = arith.constant 1 : index
    %c0_87 = arith.constant 0 : index
    %c0_88 = arith.constant 0 : index
    %147 = vector.load %arg16[%c1_86, %c0_87, %c0_88] : memref<3x16x16xbf16, #tpu.memory_space<vmem>>, vector<1x16x16xbf16>
    %148 = vector.shape_cast %147 : vector<1x16x16xbf16> to vector<16x16xbf16>
    %cst_89 = arith.constant dense<0.000000e+00> : vector<4x16xf32>
    %149 = tpu.matmul %139, %148, %cst_89 {dimension_numbers = #tpu.dot_dimension_numbers<[1], [0], [0], [1], [0, 0, 1, 1], [], []>} : vector<4x16xbf16>, vector<16x16xbf16>, vector<4x16xf32> -> vector<4x16xf32>
    %c1_90 = arith.constant 1 : index
    %c0_91 = arith.constant 0 : index
    %c0_92 = arith.constant 0 : index
    %150 = vector.load %arg18[%c1_90, %c0_91, %c0_92] : memref<3x1x16xf32, #tpu.memory_space<vmem>>, vector<1x1x16xf32>
    %151 = vector.shape_cast %150 : vector<1x1x16xf32> to vector<1x16xf32>
    %152 = vector.broadcast %151 : vector<1x16xf32> to vector<4x16xf32>
    %153 = arith.addf %149, %152 : vector<4x16xf32>
    %c2_93 = arith.constant 2 : index
    %c0_94 = arith.constant 0 : index
    %c0_95 = arith.constant 0 : index
    %154 = vector.load %arg16[%c2_93, %c0_94, %c0_95] : memref<3x16x16xbf16, #tpu.memory_space<vmem>>, vector<1x16x16xbf16>
    %155 = vector.shape_cast %154 : vector<1x16x16xbf16> to vector<16x16xbf16>
    %cst_96 = arith.constant dense<0.000000e+00> : vector<4x16xf32>
    %156 = tpu.matmul %139, %155, %cst_96 {dimension_numbers = #tpu.dot_dimension_numbers<[1], [0], [0], [1], [0, 0, 1, 1], [], []>} : vector<4x16xbf16>, vector<16x16xbf16>, vector<4x16xf32> -> vector<4x16xf32>
    %c2_97 = arith.constant 2 : index
    %c0_98 = arith.constant 0 : index
    %c0_99 = arith.constant 0 : index
    %157 = vector.load %arg18[%c2_97, %c0_98, %c0_99] : memref<3x1x16xf32, #tpu.memory_space<vmem>>, vector<1x1x16xf32>
    %158 = vector.shape_cast %157 : vector<1x1x16xf32> to vector<1x16xf32>
    %159 = vector.broadcast %158 : vector<1x16xf32> to vector<4x16xf32>
    %160 = arith.addf %156, %159 : vector<4x16xf32>
    %cst_100 = arith.constant 0.000000e+00 : f32
    %161 = vector.broadcast %cst_100 : f32 to vector<2x16xf32>
    %162 = arith.truncf %161 : vector<2x16xf32> to vector<2x16xbf16>
    %c0_101 = arith.constant 0 : index
    %c0_102 = arith.constant 0 : index
    %c0_103 = arith.constant 0 : index
    %163 = vector.load %arg17[%c0_101, %c0_102, %c0_103] : memref<3x16x16xbf16, #tpu.memory_space<vmem>>, vector<1x16x16xbf16>
    %164 = vector.shape_cast %163 : vector<1x16x16xbf16> to vector<16x16xbf16>
    %cst_104 = arith.constant dense<0.000000e+00> : vector<2x16xf32>
    %165 = tpu.matmul %162, %164, %cst_104 {dimension_numbers = #tpu.dot_dimension_numbers<[1], [0], [0], [1], [0, 0, 1, 1], [], []>} : vector<2x16xbf16>, vector<16x16xbf16>, vector<2x16xf32> -> vector<2x16xf32>
    %c0_105 = arith.constant 0 : index
    %c0_106 = arith.constant 0 : index
    %c0_107 = arith.constant 0 : index
    %166 = vector.load %arg19[%c0_105, %c0_106, %c0_107] : memref<3x1x16xf32, #tpu.memory_space<vmem>>, vector<1x1x16xf32>
    %167 = vector.shape_cast %166 : vector<1x1x16xf32> to vector<1x16xf32>
    %168 = vector.broadcast %167 : vector<1x16xf32> to vector<2x16xf32>
    %169 = arith.addf %165, %168 : vector<2x16xf32>
    %c1_108 = arith.constant 1 : index
    %c0_109 = arith.constant 0 : index
    %c0_110 = arith.constant 0 : index
    %170 = vector.load %arg17[%c1_108, %c0_109, %c0_110] : memref<3x16x16xbf16, #tpu.memory_space<vmem>>, vector<1x16x16xbf16>
    %171 = vector.shape_cast %170 : vector<1x16x16xbf16> to vector<16x16xbf16>
    %cst_111 = arith.constant dense<0.000000e+00> : vector<2x16xf32>
    %172 = tpu.matmul %162, %171, %cst_111 {dimension_numbers = #tpu.dot_dimension_numbers<[1], [0], [0], [1], [0, 0, 1, 1], [], []>} : vector<2x16xbf16>, vector<16x16xbf16>, vector<2x16xf32> -> vector<2x16xf32>
    %c1_112 = arith.constant 1 : index
    %c0_113 = arith.constant 0 : index
    %c0_114 = arith.constant 0 : index
    %173 = vector.load %arg19[%c1_112, %c0_113, %c0_114] : memref<3x1x16xf32, #tpu.memory_space<vmem>>, vector<1x1x16xf32>
    %174 = vector.shape_cast %173 : vector<1x1x16xf32> to vector<1x16xf32>
    %175 = vector.broadcast %174 : vector<1x16xf32> to vector<2x16xf32>
    %176 = arith.addf %172, %175 : vector<2x16xf32>
    %c2_115 = arith.constant 2 : index
    %c0_116 = arith.constant 0 : index
    %c0_117 = arith.constant 0 : index
    %177 = vector.load %arg17[%c2_115, %c0_116, %c0_117] : memref<3x16x16xbf16, #tpu.memory_space<vmem>>, vector<1x16x16xbf16>
    %178 = vector.shape_cast %177 : vector<1x16x16xbf16> to vector<16x16xbf16>
    %cst_118 = arith.constant dense<0.000000e+00> : vector<2x16xf32>
    %179 = tpu.matmul %162, %178, %cst_118 {dimension_numbers = #tpu.dot_dimension_numbers<[1], [0], [0], [1], [0, 0, 1, 1], [], []>} : vector<2x16xbf16>, vector<16x16xbf16>, vector<2x16xf32> -> vector<2x16xf32>
    %c2_119 = arith.constant 2 : index
    %c0_120 = arith.constant 0 : index
    %c0_121 = arith.constant 0 : index
    %180 = vector.load %arg19[%c2_119, %c0_120, %c0_121] : memref<3x1x16xf32, #tpu.memory_space<vmem>>, vector<1x1x16xf32>
    %181 = vector.shape_cast %180 : vector<1x1x16xf32> to vector<1x16xf32>
    %182 = vector.broadcast %181 : vector<1x16xf32> to vector<2x16xf32>
    %183 = arith.addf %179, %182 : vector<2x16xf32>
    %184 = vector.extract_strided_slice %146 {offsets = [0, 0], sizes = [2, 16], strides = [1, 1]} : vector<4x16xf32> to vector<2x16xf32>
    %185 = arith.addf %184, %169 : vector<2x16xf32>
    %186 = arith.negf %185 : vector<2x16xf32>
    %187 = math.exp %186 : vector<2x16xf32>
    %cst_122 = arith.constant 1.000000e+00 : f32
    %188 = vector.broadcast %cst_122 : f32 to vector<2x16xf32>
    %189 = arith.addf %188, %187 : vector<2x16xf32>
    %190 = arith.divf %188, %189 : vector<2x16xf32>
    %191 = vector.extract_strided_slice %153 {offsets = [0, 0], sizes = [2, 16], strides = [1, 1]} : vector<4x16xf32> to vector<2x16xf32>
    %192 = arith.addf %191, %176 : vector<2x16xf32>
    %193 = arith.negf %192 : vector<2x16xf32>
    %194 = math.exp %193 : vector<2x16xf32>
    %cst_123 = arith.constant 1.000000e+00 : f32
    %195 = vector.broadcast %cst_123 : f32 to vector<2x16xf32>
    %196 = arith.addf %195, %194 : vector<2x16xf32>
    %197 = arith.divf %195, %196 : vector<2x16xf32>
    %198 = vector.extract_strided_slice %160 {offsets = [0, 0], sizes = [2, 16], strides = [1, 1]} : vector<4x16xf32> to vector<2x16xf32>
    %199 = arith.mulf %190, %183 : vector<2x16xf32>
    %200 = arith.addf %198, %199 : vector<2x16xf32>
    %201 = math.tanh %200 : vector<2x16xf32>
    %cst_124 = arith.constant 1.000000e+00 : f32
    %202 = vector.broadcast %cst_124 : f32 to vector<2x16xf32>
    %203 = arith.subf %202, %197 : vector<2x16xf32>
    %204 = arith.mulf %203, %201 : vector<2x16xf32>
    %205 = arith.mulf %197, %161 : vector<2x16xf32>
    %206 = arith.addf %204, %205 : vector<2x16xf32>
    %207 = arith.truncf %206 : vector<2x16xf32> to vector<2x16xbf16>
    %c0_125 = arith.constant 0 : index
    %c0_126 = arith.constant 0 : index
    %c0_127 = arith.constant 0 : index
    %208 = vector.load %arg17[%c0_125, %c0_126, %c0_127] : memref<3x16x16xbf16, #tpu.memory_space<vmem>>, vector<1x16x16xbf16>
    %209 = vector.shape_cast %208 : vector<1x16x16xbf16> to vector<16x16xbf16>
    %cst_128 = arith.constant dense<0.000000e+00> : vector<2x16xf32>
    %210 = tpu.matmul %207, %209, %cst_128 {dimension_numbers = #tpu.dot_dimension_numbers<[1], [0], [0], [1], [0, 0, 1, 1], [], []>} : vector<2x16xbf16>, vector<16x16xbf16>, vector<2x16xf32> -> vector<2x16xf32>
    %c0_129 = arith.constant 0 : index
    %c0_130 = arith.constant 0 : index
    %c0_131 = arith.constant 0 : index
    %211 = vector.load %arg19[%c0_129, %c0_130, %c0_131] : memref<3x1x16xf32, #tpu.memory_space<vmem>>, vector<1x1x16xf32>
    %212 = vector.shape_cast %211 : vector<1x1x16xf32> to vector<1x16xf32>
    %213 = vector.broadcast %212 : vector<1x16xf32> to vector<2x16xf32>
    %214 = arith.addf %210, %213 : vector<2x16xf32>
    %c1_132 = arith.constant 1 : index
    %c0_133 = arith.constant 0 : index
    %c0_134 = arith.constant 0 : index
    %215 = vector.load %arg17[%c1_132, %c0_133, %c0_134] : memref<3x16x16xbf16, #tpu.memory_space<vmem>>, vector<1x16x16xbf16>
    %216 = vector.shape_cast %215 : vector<1x16x16xbf16> to vector<16x16xbf16>
    %cst_135 = arith.constant dense<0.000000e+00> : vector<2x16xf32>
    %217 = tpu.matmul %207, %216, %cst_135 {dimension_numbers = #tpu.dot_dimension_numbers<[1], [0], [0], [1], [0, 0, 1, 1], [], []>} : vector<2x16xbf16>, vector<16x16xbf16>, vector<2x16xf32> -> vector<2x16xf32>
    %c1_136 = arith.constant 1 : index
    %c0_137 = arith.constant 0 : index
    %c0_138 = arith.constant 0 : index
    %218 = vector.load %arg19[%c1_136, %c0_137, %c0_138] : memref<3x1x16xf32, #tpu.memory_space<vmem>>, vector<1x1x16xf32>
    %219 = vector.shape_cast %218 : vector<1x1x16xf32> to vector<1x16xf32>
    %220 = vector.broadcast %219 : vector<1x16xf32> to vector<2x16xf32>
    %221 = arith.addf %217, %220 : vector<2x16xf32>
    %c2_139 = arith.constant 2 : index
    %c0_140 = arith.constant 0 : index
    %c0_141 = arith.constant 0 : index
    %222 = vector.load %arg17[%c2_139, %c0_140, %c0_141] : memref<3x16x16xbf16, #tpu.memory_space<vmem>>, vector<1x16x16xbf16>
    %223 = vector.shape_cast %222 : vector<1x16x16xbf16> to vector<16x16xbf16>
    %cst_142 = arith.constant dense<0.000000e+00> : vector<2x16xf32>
    %224 = tpu.matmul %207, %223, %cst_142 {dimension_numbers = #tpu.dot_dimension_numbers<[1], [0], [0], [1], [0, 0, 1, 1], [], []>} : vector<2x16xbf16>, vector<16x16xbf16>, vector<2x16xf32> -> vector<2x16xf32>
    %c2_143 = arith.constant 2 : index
    %c0_144 = arith.constant 0 : index
    %c0_145 = arith.constant 0 : index
    %225 = vector.load %arg19[%c2_143, %c0_144, %c0_145] : memref<3x1x16xf32, #tpu.memory_space<vmem>>, vector<1x1x16xf32>
    %226 = vector.shape_cast %225 : vector<1x1x16xf32> to vector<1x16xf32>
    %227 = vector.broadcast %226 : vector<1x16xf32> to vector<2x16xf32>
    %228 = arith.addf %224, %227 : vector<2x16xf32>
    %229 = vector.extract_strided_slice %146 {offsets = [2, 0], sizes = [2, 16], strides = [1, 1]} : vector<4x16xf32> to vector<2x16xf32>
    %230 = arith.addf %229, %214 : vector<2x16xf32>
    %231 = arith.negf %230 : vector<2x16xf32>
    %232 = math.exp %231 : vector<2x16xf32>
    %cst_146 = arith.constant 1.000000e+00 : f32
    %233 = vector.broadcast %cst_146 : f32 to vector<2x16xf32>
    %234 = arith.addf %233, %232 : vector<2x16xf32>
    %235 = arith.divf %233, %234 : vector<2x16xf32>
    %236 = vector.extract_strided_slice %153 {offsets = [2, 0], sizes = [2, 16], strides = [1, 1]} : vector<4x16xf32> to vector<2x16xf32>
    %237 = arith.addf %236, %221 : vector<2x16xf32>
    %238 = arith.negf %237 : vector<2x16xf32>
    %239 = math.exp %238 : vector<2x16xf32>
    %cst_147 = arith.constant 1.000000e+00 : f32
    %240 = vector.broadcast %cst_147 : f32 to vector<2x16xf32>
    %241 = arith.addf %240, %239 : vector<2x16xf32>
    %242 = arith.divf %240, %241 : vector<2x16xf32>
    %243 = vector.extract_strided_slice %160 {offsets = [2, 0], sizes = [2, 16], strides = [1, 1]} : vector<4x16xf32> to vector<2x16xf32>
    %244 = arith.mulf %235, %228 : vector<2x16xf32>
    %245 = arith.addf %243, %244 : vector<2x16xf32>
    %246 = math.tanh %245 : vector<2x16xf32>
    %cst_148 = arith.constant 1.000000e+00 : f32
    %247 = vector.broadcast %cst_148 : f32 to vector<2x16xf32>
    %248 = arith.subf %247, %242 : vector<2x16xf32>
    %249 = arith.mulf %248, %246 : vector<2x16xf32>
    %250 = arith.mulf %242, %206 : vector<2x16xf32>
    %251 = arith.addf %249, %250 : vector<2x16xf32>
    %c0_149 = arith.constant 0 : index
    %c0_150 = arith.constant 0 : index
    %252 = vector.load %arg20[%c0_149, %c0_150] : memref<2x16xf32, #tpu.memory_space<vmem>>, vector<2x16xf32>
    tpu.vector_store %arg20[%c0_149, %c0_150], %251 {strides = array<i32>} : memref<2x16xf32, #tpu.memory_space<vmem>>, vector<2x16xf32>,
    return
  }
}

</mosaic_0001>

<llo_original>
// kernel: reference_encoder_forward.1
$region0: #{reference_encoder_forward.1}
  #allocation0 [shape = 'u32[]', space=smem, size = 0x4, offset = 0x4, fixed_abs, tag = 'smem constant byte address 0x4 - core index']
  #allocation1 [shape = 'u32[144,128]{1,0:T(1,128)}', space=vmem, size = 0x12000, scoped, tag = 'internal scratch']
  %s0 = inlined_call_operand.hbm [shape: f32[32,16], index: 0, kind: input, shape index: {}]
  %s1 = inlined_call_operand.vmem [shape: bf16[3,16,32], index: 1, kind: input, shape index: {}]
  %s2 = inlined_call_operand.hbm [shape: bf16[16,96], index: 2, kind: input, shape index: {}]
  %s3 = inlined_call_operand.hbm [shape: f32[32,32], index: 3, kind: input, shape index: {}]
  %s4 = inlined_call_operand.hbm [shape: f32[1,32], index: 4, kind: input, shape index: {}]
  %s5 = inlined_call_operand.hbm [shape: f32[1,32], index: 5, kind: input, shape index: {}]
  %s6 = inlined_call_operand.hbm [shape: bf16[3,8,16], index: 6, kind: input, shape index: {}]
  %s7 = inlined_call_operand.hbm [shape: bf16[32,48], index: 7, kind: input, shape index: {}]
  %s8 = inlined_call_operand.hbm [shape: f32[16,16], index: 8, kind: input, shape index: {}]
  %s9 = inlined_call_operand.hbm [shape: f32[1,16], index: 9, kind: input, shape index: {}]
  %s10 = inlined_call_operand.hbm [shape: f32[1,16], index: 10, kind: input, shape index: {}]
  %s11 = inlined_call_operand.vmem [shape: bf16[3,4,8], index: 11, kind: input, shape index: {}]
  %s12 = inlined_call_operand.vmem [shape: bf16[16,48], index: 12, kind: input, shape index: {}]
  %s13 = inlined_call_operand.hbm [shape: f32[16,16], index: 13, kind: input, shape index: {}]
  %s14 = inlined_call_operand.vmem [shape: f32[1,16], index: 14, kind: input, shape index: {}]
  %s15 = inlined_call_operand.hbm [shape: f32[1,16], index: 15, kind: input, shape index: {}]
  %s16 = inlined_call_operand.vmem [shape: bf16[3,16,16], index: 16, kind: input, shape index: {}]
  %s17 = inlined_call_operand.hbm [shape: bf16[3,16,16], index: 17, kind: input, shape index: {}]
  %s18 = inlined_call_operand.hbm [shape: f32[3,1,16], index: 18, kind: input, shape index: {}]
  %s19 = inlined_call_operand.hbm [shape: f32[3,1,16], index: 19, kind: input, shape index: {}]
  %s20 = inlined_call_operand.hbm [shape: f32[2,16], index: 20, kind: output, shape index: {}]
  %s21 = sld [smem:[#allocation0]]
  $region150: #{reference_encoder_forward.1} parent=0
    _
  %s23 = ssub.s32 1, %s21
  %s24 = scalar_select 0, %s23, %s21
  $region1: #{reference_encoder_forward.1} parent=0
    #allocation2 [shape = 'u8[16384]{0}', space=vmem, size = 0x4000, scoped, tag = 'input window, operand 0, single buffered']
    #allocation3 [shape = 's32[1]{0}', space=sflag, size = 0x4, scoped, tag = 'scoped memory for reference_encoder_forward.1']
    #allocation4 [shape = 's32[1]{0}', space=sflag, size = 0x4, scoped, tag = 'scoped memory for reference_encoder_forward.1']
    #allocation5 [shape = 'u8[4096]{0}', space=vmem, size = 0x1000, scoped, tag = 'input window, operand 2, single buffered']
    #allocation6 [shape = 's32[1]{0}', space=sflag, size = 0x4, scoped, tag = 'scoped memory for reference_encoder_forward.1']
    #allocation7 [shape = 'u8[16384]{0}', space=vmem, size = 0x4000, scoped, tag = 'input window, operand 3, single buffered']
    #allocation8 [shape = 'u8[512]{0}', space=vmem, size = 0x400, scoped, tag = 'input window, operand 4, single buffered']
    #allocation9 [shape = 's32[1]{0}', space=sflag, size = 0x4, scoped, tag = 'scoped memory for reference_encoder_forward.1']
    #allocation10 [shape = 'u8[512]{0}', space=vmem, size = 0x400, scoped, tag = 'input window, operand 5, single buffered']
    #allocation11 [shape = 'u8[6144]{0}', space=vmem, size = 0x1800, scoped, tag = 'input window, operand 6, single buffered']
    #allocation12 [shape = 's32[1]{0}', space=sflag, size = 0x4, scoped, tag = 'scoped memory for reference_encoder_forward.1']
    #allocation13 [shape = 'u8[8192]{0}', space=vmem, size = 0x2000, scoped, tag = 'input window, operand 7, single buffered']
    #allocation14 [shape = 'u8[8192]{0}', space=vmem, size = 0x2000, scoped, tag = 'input window, operand 8, single buffered']
    #allocation15 [shape = 's32[1]{0}', space=sflag, size = 0x4, scoped, tag = 'scoped memory for reference_encoder_forward.1']
    #allocation16 [shape = 'u8[512]{0}', space=vmem, size = 0x400, scoped, tag = 'input window, operand 9, single buffered']
    #allocation17 [shape = 'u8[512]{0}', space=vmem, size = 0x400, scoped, tag = 'input window, operand 10, single buffered']
    #allocation18 [shape = 's32[1]{0}', space=sflag, size = 0x4, scoped, tag = 'scoped memory for reference_encoder_forward.1']
    #allocation19 [shape = 'u8[8192]{0}', space=vmem, size = 0x2000, scoped, tag = 'input window, operand 13, single buffered']
    #allocation20 [shape = 'u8[512]{0}', space=vmem, size = 0x400, scoped, tag = 'input window, operand 15, single buffered']
    #allocation21 [shape = 's32[1]{0}', space=sflag, size = 0x4, scoped, tag = 'scoped memory for reference_encoder_forward.1']
    #allocation22 [shape = 'u8[12288]{0}', space=vmem, size = 0x3000, scoped, tag = 'input window, operand 17, single buffered']
    #allocation23 [shape = 'u8[1536]{0}', space=vmem, size = 0x800, scoped, tag = 'input window, operand 18, single buffered']
    #allocation24 [shape = 's32[1]{0}', space=sflag, size = 0x4, scoped, tag = 'scoped memory for reference_encoder_forward.1']
    #allocation25 [shape = 'u8[1536]{0}', space=vmem, size = 0x800, scoped, tag = 'input window, operand 19, single buffered']
    #allocation26 [shape = 'u8[1024]{0}', space=vmem, size = 0x400, scoped, tag = 'output window, operand 0, single buffered']
    %25 = vsyncpa [#allocation3], 0
    %26 = vsyncpa [#allocation6], 0
    %27 = vsyncpa [#allocation9], 0
    %28 = vsyncpa [#allocation12], 0
    %29 = vsyncpa [#allocation15], 0
    %30 = vsyncpa [#allocation18], 0
    %31 = vsyncpa [#allocation21], 0
    %32 = vsyncpa [#allocation24], 0
    %33 = vsyncpa [#allocation4], 0
    // Predicated region
    $region2: #{reference_encoder_forward.1} parent=1 // pred_check
      _
    $region3: #{reference_encoder_forward.1} parent=1 // pred_check_branch
      %35 = sbr.rel (0) target = $region5
    $region4: #{reference_encoder_forward.1} parent=1 // pred_region
      %s37 = ssub.s32 512, 512
      %38 = vsyncadd [#allocation3], %s37
      %s39 = sshll.u32 [#allocation2], 4
      %s40 = int_to_ptr.vmem [resolvable:$true] %s39
      %45 = dma.hbm_to_vmem [thread:$0]  %s0, 512, %s40, [#allocation3], 128, 128, 8
    $region5: #{reference_encoder_forward.1} parent=1 // pred_fallthru
      _
    // Predicated region
    $region6: #{reference_encoder_forward.1} parent=1 // pred_check
      _
    $region7: #{reference_encoder_forward.1} parent=1 // pred_check_branch
      %47 = sbr.rel (0) target = $region9
    $region8: #{reference_encoder_forward.1} parent=1 // pred_region
      _
    $region9: #{reference_encoder_forward.1} parent=1 // pred_fallthru
      _
    // Predicated region
    $region10: #{reference_encoder_forward.1} parent=1 // pred_check
      _
    $region11: #{reference_encoder_forward.1} parent=1 // pred_check_branch
      %49 = sbr.rel (0) target = $region13
    $region12: #{reference_encoder_forward.1} parent=1 // pred_region
      %s51 = ssub.s32 128, 128
      %52 = vsyncadd [#allocation6], %s51
      %s53 = sshll.u32 [#allocation5], 4
      %s54 = int_to_ptr.vmem [resolvable:$true] %s53
      %59 = dma.hbm_to_vmem [thread:$0]  %s2, 128, %s54, [#allocation6], 64, 64, 4
    $region13: #{reference_encoder_forward.1} parent=1 // pred_fallthru
      _
    // Predicated region
    $region14: #{reference_encoder_forward.1} parent=1 // pred_check
      _
    $region15: #{reference_encoder_forward.1} parent=1 // pred_check_branch
      %61 = sbr.rel (0) target = $region17
    $region16: #{reference_encoder_forward.1} parent=1 // pred_region
      %s63 = ssub.s32 512, 512
      %64 = vsyncadd [#allocation6], %s63
      %s65 = sshll.u32 [#allocation7], 4
      %s66 = int_to_ptr.vmem [resolvable:$true] %s65
      %71 = dma.hbm_to_vmem [thread:$0]  %s3, 512, %s66, [#allocation6], 128, 128, 8
    $region17: #{reference_encoder_forward.1} parent=1 // pred_fallthru
      _
    // Predicated region
    $region18: #{reference_encoder_forward.1} parent=1 // pred_check
      _
    $region19: #{reference_encoder_forward.1} parent=1 // pred_check_branch
      %73 = sbr.rel (0) target = $region21
    $region20: #{reference_encoder_forward.1} parent=1 // pred_region
      %s75 = ssub.s32 16, 16
      %76 = vsyncadd [#allocation9], %s75
      %s78 = sshll.u32 [#allocation8], 4
      %s79 = int_to_ptr.vmem [resolvable:$true] %s78
      %81 = dma.hbm_to_vmem [thread:$0]  %s4, 16, %s79, [#allocation9]
    $region21: #{reference_encoder_forward.1} parent=1 // pred_fallthru
      _
    // Predicated region
    $region22: #{reference_encoder_forward.1} parent=1 // pred_check
      _
    $region23: #{reference_encoder_forward.1} parent=1 // pred_check_branch
      %83 = sbr.rel (0) target = $region25
    $region24: #{reference_encoder_forward.1} parent=1 // pred_region
      %s85 = ssub.s32 16, 16
      %86 = vsyncadd [#allocation9], %s85
      %s88 = sshll.u32 [#allocation10], 4
      %s89 = int_to_ptr.vmem [resolvable:$true] %s88
      %91 = dma.hbm_to_vmem [thread:$0]  %s5, 16, %s89, [#allocation9]
    $region25: #{reference_encoder_forward.1} parent=1 // pred_fallthru
      _
    // Predicated region
    $region26: #{reference_encoder_forward.1} parent=1 // pred_check
      _
    $region27: #{reference_encoder_forward.1} parent=1 // pred_check_branch
      %93 = sbr.rel (0) target = $region29
    $region28: #{reference_encoder_forward.1} parent=1 // pred_region
      %s95 = ssub.s32 192, 192
      %96 = vsyncadd [#allocation12], %s95
      %s97 = sshll.u32 [#allocation11], 4
      %s98 = int_to_ptr.vmem [resolvable:$true] %s97
      %103 = dma.hbm_to_vmem [thread:$0]  %s6, 192, %s98, [#allocation12], 64, 64, 4
    $region29: #{reference_encoder_forward.1} parent=1 // pred_fallthru
      _
    // Predicated region
    $region30: #{reference_encoder_forward.1} parent=1 // pred_check
      _
    $region31: #{reference_encoder_forward.1} parent=1 // pred_check_branch
      %105 = sbr.rel (0) target = $region33
    $region32: #{reference_encoder_forward.1} parent=1 // pred_region
      %s107 = ssub.s32 256, 256
      %108 = vsyncadd [#allocation12], %s107
      %s109 = sshll.u32 [#allocation13], 4
      %s110 = int_to_ptr.vmem [resolvable:$true] %s109
      %115 = dma.hbm_to_vmem [thread:$0]  %s7, 256, %s110, [#allocation12], 64, 64, 4
    $region33: #{reference_encoder_forward.1} parent=1 // pred_fallthru
      _
    // Predicated region
    $region34: #{reference_encoder_forward.1} parent=1 // pred_check
      _
    $region35: #{reference_encoder_forward.1} parent=1 // pred_check_branch
      %117 = sbr.rel (0) target = $region37
    $region36: #{reference_encoder_forward.1} parent=1 // pred_region
      %s119 = ssub.s32 256, 256
      %120 = vsyncadd [#allocation15], %s119
      %s121 = sshll.u32 [#allocation14], 4
      %s122 = int_to_ptr.vmem [resolvable:$true] %s121
      %127 = dma.hbm_to_vmem [thread:$0]  %s8, 256, %s122, [#allocation15], 128, 128, 8
    $region37: #{reference_encoder_forward.1} parent=1 // pred_fallthru
      _
    // Predicated region
    $region38: #{reference_encoder_forward.1} parent=1 // pred_check
      _
    $region39: #{reference_encoder_forward.1} parent=1 // pred_check_branch
      %129 = sbr.rel (0) target = $region41
    $region40: #{reference_encoder_forward.1} parent=1 // pred_region
      %s131 = ssub.s32 16, 16
      %132 = vsyncadd [#allocation15], %s131
      %s134 = sshll.u32 [#allocation16], 4
      %s135 = int_to_ptr.vmem [resolvable:$true] %s134
      %137 = dma.hbm_to_vmem [thread:$0]  %s9, 16, %s135, [#allocation15]
    $region41: #{reference_encoder_forward.1} parent=1 // pred_fallthru
      _
    // Predicated region
    $region42: #{reference_encoder_forward.1} parent=1 // pred_check
      _
    $region43: #{reference_encoder_forward.1} parent=1 // pred_check_branch
      %139 = sbr.rel (0) target = $region45
    $region44: #{reference_encoder_forward.1} parent=1 // pred_region
      %s141 = ssub.s32 16, 16
      %142 = vsyncadd [#allocation18], %s141
      %s144 = sshll.u32 [#allocation17], 4
      %s145 = int_to_ptr.vmem [resolvable:$true] %s144
      %147 = dma.hbm_to_vmem [thread:$0]  %s10, 16, %s145, [#allocation18]
    $region45: #{reference_encoder_forward.1} parent=1 // pred_fallthru
      _
    // Predicated region
    $region46: #{reference_encoder_forward.1} parent=1 // pred_check
      _
    $region47: #{reference_encoder_forward.1} parent=1 // pred_check_branch
      %149 = sbr.rel (0) target = $region49
    $region48: #{reference_encoder_forward.1} parent=1 // pred_region
      _
    $region49: #{reference_encoder_forward.1} parent=1 // pred_fallthru
      _
    // Predicated region
    $region50: #{reference_encoder_forward.1} parent=1 // pred_check
      _
    $region51: #{reference_encoder_forward.1} parent=1 // pred_check_branch
      %151 = sbr.rel (0) target = $region53
    $region52: #{reference_encoder_forward.1} parent=1 // pred_region
      _
    $region53: #{reference_encoder_forward.1} parent=1 // pred_fallthru
      _
    // Predicated region
    $region54: #{reference_encoder_forward.1} parent=1 // pred_check
      _
    $region55: #{reference_encoder_forward.1} parent=1 // pred_check_branch
      %153 = sbr.rel (0) target = $region57
    $region56: #{reference_encoder_forward.1} parent=1 // pred_region
      %s155 = ssub.s32 256, 256
      %156 = vsyncadd [#allocation18], %s155
      %s157 = sshll.u32 [#allocation19], 4
      %s158 = int_to_ptr.vmem [resolvable:$true] %s157
      %163 = dma.hbm_to_vmem [thread:$0]  %s13, 256, %s158, [#allocation18], 128, 128, 8
    $region57: #{reference_encoder_forward.1} parent=1 // pred_fallthru
      _
    // Predicated region
    $region58: #{reference_encoder_forward.1} parent=1 // pred_check
      _
    $region59: #{reference_encoder_forward.1} parent=1 // pred_check_branch
      %165 = sbr.rel (0) target = $region61
    $region60: #{reference_encoder_forward.1} parent=1 // pred_region
      _
    $region61: #{reference_encoder_forward.1} parent=1 // pred_fallthru
      _
    // Predicated region
    $region62: #{reference_encoder_forward.1} parent=1 // pred_check
      _
    $region63: #{reference_encoder_forward.1} parent=1 // pred_check_branch
      %167 = sbr.rel (0) target = $region65
    $region64: #{reference_encoder_forward.1} parent=1 // pred_region
      %s169 = ssub.s32 16, 16
      %170 = vsyncadd [#allocation21], %s169
      %s172 = sshll.u32 [#allocation20], 4
      %s173 = int_to_ptr.vmem [resolvable:$true] %s172
      %175 = dma.hbm_to_vmem [thread:$0]  %s15, 16, %s173, [#allocation21]
    $region65: #{reference_encoder_forward.1} parent=1 // pred_fallthru
      _
    // Predicated region
    $region66: #{reference_encoder_forward.1} parent=1 // pred_check
      _
    $region67: #{reference_encoder_forward.1} parent=1 // pred_check_branch
      %177 = sbr.rel (0) target = $region69
    $region68: #{reference_encoder_forward.1} parent=1 // pred_region
      _
    $region69: #{reference_encoder_forward.1} parent=1 // pred_fallthru
      _
    // Predicated region
    $region70: #{reference_encoder_forward.1} parent=1 // pred_check
      _
    $region71: #{reference_encoder_forward.1} parent=1 // pred_check_branch
      %179 = sbr.rel (0) target = $region73
    $region72: #{reference_encoder_forward.1} parent=1 // pred_region
      %s181 = ssub.s32 384, 384
      %182 = vsyncadd [#allocation21], %s181
      %s183 = sshll.u32 [#allocation22], 4
      %s184 = int_to_ptr.vmem [resolvable:$true] %s183
      %189 = dma.hbm_to_vmem [thread:$0]  %s17, 384, %s184, [#allocation21], 64, 64, 4
    $region73: #{reference_encoder_forward.1} parent=1 // pred_fallthru
      _
    // Predicated region
    $region74: #{reference_encoder_forward.1} parent=1 // pred_check
      _
    $region75: #{reference_encoder_forward.1} parent=1 // pred_check_branch
      %191 = sbr.rel (0) target = $region77
    $region76: #{reference_encoder_forward.1} parent=1 // pred_region
      %s193 = ssub.s32 48, 48
      %194 = vsyncadd [#allocation24], %s193
      %s195 = sshll.u32 [#allocation23], 4
      %s196 = int_to_ptr.vmem [resolvable:$true] %s195
      %201 = dma.hbm_to_vmem [thread:$0]  %s18, 48, %s196, [#allocation24], 16, 16, 1
    $region77: #{reference_encoder_forward.1} parent=1 // pred_fallthru
      _
    // Predicated region
    $region78: #{reference_encoder_forward.1} parent=1 // pred_check
      _
    $region79: #{reference_encoder_forward.1} parent=1 // pred_check_branch
      %203 = sbr.rel (0) target = $region81
    $region80: #{reference_encoder_forward.1} parent=1 // pred_region
      %s205 = ssub.s32 48, 48
      %206 = vsyncadd [#allocation24], %s205
      %s207 = sshll.u32 [#allocation25], 4
      %s208 = int_to_ptr.vmem [resolvable:$true] %s207
      %213 = dma.hbm_to_vmem [thread:$0]  %s19, 48, %s208, [#allocation24], 16, 16, 1
    $region81: #{reference_encoder_forward.1} parent=1 // pred_fallthru
      _
    // Predicated region
    $region82: #{reference_encoder_forward.1} parent=1 // pred_check
      _
    $region83: #{reference_encoder_forward.1} parent=1 // pred_check_branch
      %215 = sbr.rel (0) target = $region85
    $region84: #{reference_encoder_forward.1} parent=1 // pred_region
      %216 = dma.done [#allocation3], 512
    $region85: #{reference_encoder_forward.1} parent=1 // pred_fallthru
      _
    // Predicated region
    $region86: #{reference_encoder_forward.1} parent=1 // pred_check
      _
    $region87: #{reference_encoder_forward.1} parent=1 // pred_check_branch
      %218 = sbr.rel (0) target = $region89
    $region88: #{reference_encoder_forward.1} parent=1 // pred_region
      %219 = dma.done [#allocation6], 128
    $region89: #{reference_encoder_forward.1} parent=1 // pred_fallthru
      _
    // Predicated region
    $region90: #{reference_encoder_forward.1} parent=1 // pred_check
      _
    $region91: #{reference_encoder_forward.1} parent=1 // pred_check_branch
      %221 = sbr.rel (0) target = $region93
    $region92: #{reference_encoder_forward.1} parent=1 // pred_region
      %222 = dma.done [#allocation6], 512
    $region93: #{reference_encoder_forward.1} parent=1 // pred_fallthru
      _
    // Predicated region
    $region94: #{reference_encoder_forward.1} parent=1 // pred_check
      _
    $region95: #{reference_encoder_forward.1} parent=1 // pred_check_branch
      %224 = sbr.rel (0) target = $region97
    $region96: #{reference_encoder_forward.1} parent=1 // pred_region
      %225 = dma.done [#allocation9], 16
    $region97: #{reference_encoder_forward.1} parent=1 // pred_fallthru
      _
    // Predicated region
    $region98: #{reference_encoder_forward.1} parent=1 // pred_check
      _
    $region99: #{reference_encoder_forward.1} parent=1 // pred_check_branch
      %227 = sbr.rel (0) target = $region101
    $region100: #{reference_encoder_forward.1} parent=1 // pred_region
      %228 = dma.done [#allocation9], 16
    $region101: #{reference_encoder_forward.1} parent=1 // pred_fallthru
      _
    // Predicated region
    $region102: #{reference_encoder_forward.1} parent=1 // pred_check
      _
    $region103: #{reference_encoder_forward.1} parent=1 // pred_check_branch
      %230 = sbr.rel (0) target = $region105
    $region104: #{reference_encoder_forward.1} parent=1 // pred_region
      %231 = dma.done [#allocation12], 192
    $region105: #{reference_encoder_forward.1} parent=1 // pred_fallthru
      _
    // Predicated region
    $region106: #{reference_encoder_forward.1} parent=1 // pred_check
      _
    $region107: #{reference_encoder_forward.1} parent=1 // pred_check_branch
      %233 = sbr.rel (0) target = $region109
    $region108: #{reference_encoder_forward.1} parent=1 // pred_region
      %234 = dma.done [#allocation12], 256
    $region109: #{reference_encoder_forward.1} parent=1 // pred_fallthru
      _
    // Predicated region
    $region110: #{reference_encoder_forward.1} parent=1 // pred_check
      _
    $region111: #{reference_encoder_forward.1} parent=1 // pred_check_branch
      %236 = sbr.rel (0) target = $region113
    $region112: #{reference_encoder_forward.1} parent=1 // pred_region
      %237 = dma.done [#allocation15], 256
    $region113: #{reference_encoder_forward.1} parent=1 // pred_fallthru
      _
    // Predicated region
    $region114: #{reference_encoder_forward.1} parent=1 // pred_check
      _
    $region115: #{reference_encoder_forward.1} parent=1 // pred_check_branch
      %239 = sbr.rel (0) target = $region117
    $region116: #{reference_encoder_forward.1} parent=1 // pred_region
      %240 = dma.done [#allocation15], 16
    $region117: #{reference_encoder_forward.1} parent=1 // pred_fallthru
      _
    // Predicated region
    $region118: #{reference_encoder_forward.1} parent=1 // pred_check
      _
    $region119: #{reference_encoder_forward.1} parent=1 // pred_check_branch
      %242 = sbr.rel (0) target = $region121
    $region120: #{reference_encoder_forward.1} parent=1 // pred_region
      %243 = dma.done [#allocation18], 16
    $region121: #{reference_encoder_forward.1} parent=1 // pred_fallthru
      _
    // Predicated region
    $region122: #{reference_encoder_forward.1} parent=1 // pred_check
      _
    $region123: #{reference_encoder_forward.1} parent=1 // pred_check_branch
      %245 = sbr.rel (0) target = $region125
    $region124: #{reference_encoder_forward.1} parent=1 // pred_region
      %246 = dma.done [#allocation18], 256
    $region125: #{reference_encoder_forward.1} parent=1 // pred_fallthru
      _
    // Predicated region
    $region126: #{reference_encoder_forward.1} parent=1 // pred_check
      _
    $region127: #{reference_encoder_forward.1} parent=1 // pred_check_branch
      %248 = sbr.rel (0) target = $region129
    $region128: #{reference_encoder_forward.1} parent=1 // pred_region
      %249 = dma.done [#allocation21], 16
    $region129: #{reference_encoder_forward.1} parent=1 // pred_fallthru
      _
    // Predicated region
    $region130: #{reference_encoder_forward.1} parent=1 // pred_check
      _
    $region131: #{reference_encoder_forward.1} parent=1 // pred_check_branch
      %251 = sbr.rel (0) target = $region133
    $region132: #{reference_encoder_forward.1} parent=1 // pred_region
      %252 = dma.done [#allocation21], 384
    $region133: #{reference_encoder_forward.1} parent=1 // pred_fallthru
      _
    // Predicated region
    $region134: #{reference_encoder_forward.1} parent=1 // pred_check
      _
    $region135: #{reference_encoder_forward.1} parent=1 // pred_check_branch
      %254 = sbr.rel (0) target = $region137
    $region136: #{reference_encoder_forward.1} parent=1 // pred_region
      %255 = dma.done [#allocation24], 48
    $region137: #{reference_encoder_forward.1} parent=1 // pred_fallthru
      _
    // Predicated region
    $region138: #{reference_encoder_forward.1} parent=1 // pred_check
      _
    $region139: #{reference_encoder_forward.1} parent=1 // pred_check_branch
      %257 = sbr.rel (0) target = $region141
    $region140: #{reference_encoder_forward.1} parent=1 // pred_region
      %258 = dma.done [#allocation24], 48
    $region141: #{reference_encoder_forward.1} parent=1 // pred_fallthru
      _
    %v260 = vld [vmem:[#allocation2] sm:$0xff]
    %v261 = vld [vmem:[#allocation2 + $0x8] sm:$0xff]
    %v262 = vld [vmem:[#allocation2 + $0x10] sm:$0xff]
    %v263 = vld [vmem:[#allocation2 + $0x18] sm:$0xff]
    %v264 = vpack.c.bf16 %v261, %v260
    %v265 = vpack.c.bf16 %v263, %v262
    %v266 = vld [vmem:[#allocation5] sm:$0xf]
    %v267 = vld [vmem:[#allocation5 + $0x4] sm:$0xf]
    %v270 = vunpack.c.l.b16 %v266
    %v271 = vunpack.c.l.b16 %v267
    %v272 = vpack.c.b16 %v271, %v270
    %vm274 = vcmask 130048
    %v276 = vsel %vm274, %v264, 0
    %v279 = vsel %vm274, %v265, 0
    %281 = vmatprep.subr.bf16.mxu0 0
    %282 = vmatpush1.bf16.msra.mxu0 %v272
    %283 = vmatprep.subr.bf16.mxu0 0
    %284 = vmatpush1.bf16.msra.mxu0 0
    %285 = vmatprep.subr.bf16.mxu0 0
    %286 = vmatpush1.bf16.msra.mxu0 0
    %287 = vmatprep.subr.bf16.mxu0 0
    %288 = vmatpush1.bf16.msra.mxu0 0
    %289 = vmatprep.subr.bf16.mxu0 0
    %290 = vmatpush1.bf16.msra.mxu0 0
    %291 = vmatprep.subr.bf16.mxu0 0
    %292 = vmatpush1.bf16.msra.mxu0 0
    %293 = vmatprep.subr.bf16.mxu0 0
    %294 = vmatpush1.bf16.msra.mxu0 0
    %295 = vmatprep.subr.bf16.mxu0 0
    %296 = vmatpush1.bf16.msra.mxu0 0
    %297 = vmatprep.subr.bf16.mxu0 0
    %298 = vmatpush1.bf16.msra.mxu0 0
    %299 = vmatprep.subr.bf16.mxu0 0
    %300 = vmatpush1.bf16.msra.mxu0 0
    %301 = vmatprep.subr.bf16.mxu0 0
    %302 = vmatpush1.bf16.msra.mxu0 0
    %303 = vmatprep.subr.bf16.mxu0 0
    %304 = vmatpush1.bf16.msra.mxu0 0
    %305 = vmatprep.subr.bf16.mxu0 0
    %306 = vmatpush1.bf16.msra.mxu0 0
    %307 = vmatprep.subr.bf16.mxu0 0
    %308 = vmatpush1.bf16.msra.mxu0 0
    %309 = vmatprep.subr.bf16.mxu0 0
    %310 = vmatpush1.bf16.msra.mxu0 0
    %311 = vmatprep.subr.bf16.mxu0 0
    %312 = vmatpush1.bf16.msra.mxu0 0
    %313 = vmatprep.mubr.bf16.mxu0 0
    %314 = vmatmul.mubr.bf16.gmra.mrb[0].mxu0 %v276
    %v315 = vpop.f32.mrb[0].mxu0
    %v316 = vadd.f32 0.0, %v315
    %v317 = vpop.f32.mrb[0].mxu0
    %v318 = vpop.f32.mrb[0].mxu0
    %v319 = vadd.f32 0.0, %v318
    %v320 = vpop.f32.mrb[0].mxu0
    %321 = vmatprep.mubr.bf16.mxu0 0
    %322 = vmatmul.mubr.bf16.gmra.mrb[0].mxu0 %v279
    %v323 = vpop.f32.mrb[0].mxu0
    %v324 = vadd.f32 0.0, %v323
    %v325 = vpop.f32.mrb[0].mxu0
    %v326 = vpop.f32.mrb[0].mxu0
    %v327 = vadd.f32 0.0, %v326
    %v328 = vpop.f32.mrb[0].mxu0
    %329 = vdwg.mxu0
    %v330 = vpack.c.bf16 %v319, %v316
    %v331 = vpack.c.bf16 %v327, %v324
    %v332 = vld [vmem:[%s1] sm:$0xf]
    %v333 = vld [vmem:[%s1 + $0x4] sm:$0xf]
    %s334 = scalar_lea.vmem %s1, 8
    %v335 = vld [vmem:[%s334] sm:$0xf]
    %v336 = vld [vmem:[%s334 + $0x4] sm:$0xf]
    %v339 = vunpack.c.l.b16 %v335
    %v340 = vunpack.c.l.b16 %v336
    %v341 = vpack.c.b16 %v340, %v339
    %344 = vrot.lane.b32.xlu0 %v330, 96
    %v345 = vpop.permute.xlu0 %344
    %346 = vrot.lane.b32.xlu0 %v331, 96
    %v347 = vpop.permute.xlu0 %346
    %vm350 = vcmask 261120
    %v352 = vsel %vm350, %v341, 0
    %354 = vmatprep.subr.bf16.mxu0 0
    %355 = vmatpush1.bf16.msra.mxu0 %v345
    %356 = vmatprep.subr.bf16.mxu0 0
    %357 = vmatpush1.bf16.msra.mxu0 %v347
    %358 = vmatprep.subr.bf16.mxu0 0
    %359 = vmatpush1.bf16.msra.mxu0 0
    %360 = vmatprep.subr.bf16.mxu0 0
    %361 = vmatpush1.bf16.msra.mxu0 0
    %362 = vmatprep.subr.bf16.mxu0 0
    %363 = vmatpush1.bf16.msra.mxu0 0
    %364 = vmatprep.subr.bf16.mxu0 0
    %365 = vmatpush1.bf16.msra.mxu0 0
    %366 = vmatprep.subr.bf16.mxu0 0
    %367 = vmatpush1.bf16.msra.mxu0 0
    %368 = vmatprep.subr.bf16.mxu0 0
    %369 = vmatpush1.bf16.msra.mxu0 0
    %370 = vmatprep.subr.bf16.mxu0 0
    %371 = vmatpush1.bf16.msra.mxu0 0
    %372 = vmatprep.subr.bf16.mxu0 0
    %373 = vmatpush1.bf16.msra.mxu0 0
    %374 = vmatprep.subr.bf16.mxu0 0
    %375 = vmatpush1.bf16.msra.mxu0 0
    %376 = vmatprep.subr.bf16.mxu0 0
    %377 = vmatpush1.bf16.msra.mxu0 0
    %378 = vmatprep.subr.bf16.mxu0 0
    %379 = vmatpush1.bf16.msra.mxu0 0
    %380 = vmatprep.subr.bf16.mxu0 0
    %381 = vmatpush1.bf16.msra.mxu0 0
    %382 = vmatprep.subr.bf16.mxu0 0
    %383 = vmatpush1.bf16.msra.mxu0 0
    %384 = vmatprep.subr.bf16.mxu0 0
    %385 = vmatpush1.bf16.msra.mxu0 0
    %386 = vmatprep.mubr.bf16.mxu0 0
    %387 = vmatmul.mubr.bf16.gmra.mrb[0].mxu0 %v352
    %v388 = vpop.f32.mrb[0].mxu0
    %v389 = vadd.f32 0.0, %v388
    %v390 = vpop.f32.mrb[0].mxu0
    %v391 = vpop.f32.mrb[0].mxu0
    %v392 = vadd.f32 0.0, %v391
    %v393 = vpop.f32.mrb[0].mxu0
    %394 = vdwg.mxu0
    %v397 = vunpack.c.l.b16 %v332
    %v398 = vunpack.c.l.b16 %v333
    %v399 = vpack.c.b16 %v398, %v397
    %v401 = vsel %vm350, %v399, 0
    %403 = vmatprep.subr.bf16.mxu0 0
    %404 = vmatpush1.bf16.msra.mxu0 %v330
    %405 = vmatprep.subr.bf16.mxu0 0
    %406 = vmatpush1.bf16.msra.mxu0 %v331
    %407 = vmatprep.subr.bf16.mxu0 0
    %408 = vmatpush1.bf16.msra.mxu0 0
    %409 = vmatprep.subr.bf16.mxu0 0
    %410 = vmatpush1.bf16.msra.mxu0 0
    %411 = vmatprep.subr.bf16.mxu0 0
    %412 = vmatpush1.bf16.msra.mxu0 0
    %413 = vmatprep.subr.bf16.mxu0 0
    %414 = vmatpush1.bf16.msra.mxu0 0
    %415 = vmatprep.subr.bf16.mxu0 0
    %416 = vmatpush1.bf16.msra.mxu0 0
    %417 = vmatprep.subr.bf16.mxu0 0
    %418 = vmatpush1.bf16.msra.mxu0 0
    %419 = vmatprep.subr.bf16.mxu0 0
    %420 = vmatpush1.bf16.msra.mxu0 0
    %421 = vmatprep.subr.bf16.mxu0 0
    %422 = vmatpush1.bf16.msra.mxu0 0
    %423 = vmatprep.subr.bf16.mxu0 0
    %424 = vmatpush1.bf16.msra.mxu0 0
    %425 = vmatprep.subr.bf16.mxu0 0
    %426 = vmatpush1.bf16.msra.mxu0 0
    %427 = vmatprep.subr.bf16.mxu0 0
    %428 = vmatpush1.bf16.msra.mxu0 0
    %429 = vmatprep.subr.bf16.mxu0 0
    %430 = vmatpush1.bf16.msra.mxu0 0
    %431 = vmatprep.subr.bf16.mxu0 0
    %432 = vmatpush1.bf16.msra.mxu0 0
    %433 = vmatprep.subr.bf16.mxu0 0
    %434 = vmatpush1.bf16.msra.mxu0 0
    %435 = vmatprep.mubr.bf16.mxu0 0
    %436 = vmatmul.mubr.bf16.gmra.mrb[0].mxu0 %v401
    %v437 = vpop.f32.mrb[0].mxu0
    %v438 = vadd.f32 %v389, %v437
    %v439 = vpop.f32.mrb[0].mxu0
    %v440 = vpop.f32.mrb[0].mxu0
    %v441 = vadd.f32 %v392, %v440
    %v442 = vpop.f32.mrb[0].mxu0
    %443 = vdwg.mxu0
    %s444 = scalar_lea.vmem %s1, 16
    %v445 = vld [vmem:[%s444] sm:$0xf]
    %v446 = vld [vmem:[%s444 + $0x4] sm:$0xf]
    %v449 = vunpack.c.l.b16 %v445
    %v450 = vunpack.c.l.b16 %v446
    %v451 = vpack.c.b16 %v450, %v449
    %452 = vrot.lane.b32.xlu0 %v330, 64
    %v453 = vpop.permute.xlu0 %452
    %454 = vrot.lane.b32.xlu0 %v331, 64
    %v455 = vpop.permute.xlu0 %454
    %v459 = vsel %vm350, %v451, 0
    %461 = vmatprep.subr.bf16.mxu0 0
    %462 = vmatpush1.bf16.msra.mxu0 %v453
    %463 = vmatprep.subr.bf16.mxu0 0
    %464 = vmatpush1.bf16.msra.mxu0 %v455
    %465 = vmatprep.subr.bf16.mxu0 0
    %466 = vmatpush1.bf16.msra.mxu0 0
    %467 = vmatprep.subr.bf16.mxu0 0
    %468 = vmatpush1.bf16.msra.mxu0 0
    %469 = vmatprep.subr.bf16.mxu0 0
    %470 = vmatpush1.bf16.msra.mxu0 0
    %471 = vmatprep.subr.bf16.mxu0 0
    %472 = vmatpush1.bf16.msra.mxu0 0
    %473 = vmatprep.subr.bf16.mxu0 0
    %474 = vmatpush1.bf16.msra.mxu0 0
    %475 = vmatprep.subr.bf16.mxu0 0
    %476 = vmatpush1.bf16.msra.mxu0 0
    %477 = vmatprep.subr.bf16.mxu0 0
    %478 = vmatpush1.bf16.msra.mxu0 0
    %479 = vmatprep.subr.bf16.mxu0 0
    %480 = vmatpush1.bf16.msra.mxu0 0
    %481 = vmatprep.subr.bf16.mxu0 0
    %482 = vmatpush1.bf16.msra.mxu0 0
    %483 = vmatprep.subr.bf16.mxu0 0
    %484 = vmatpush1.bf16.msra.mxu0 0
    %485 = vmatprep.subr.bf16.mxu0 0
    %486 = vmatpush1.bf16.msra.mxu0 0
    %487 = vmatprep.subr.bf16.mxu0 0
    %488 = vmatpush1.bf16.msra.mxu0 0
    %489 = vmatprep.subr.bf16.mxu0 0
    %490 = vmatpush1.bf16.msra.mxu0 0
    %491 = vmatprep.subr.bf16.mxu0 0
    %492 = vmatpush1.bf16.msra.mxu0 0
    %493 = vmatprep.mubr.bf16.mxu0 0
    %494 = vmatmul.mubr.bf16.gmra.mrb[0].mxu0 %v459
    %v495 = vpop.f32.mrb[0].mxu0
    %v496 = vadd.f32 0.0, %v495
    %v497 = vpop.f32.mrb[0].mxu0
    %v498 = vpop.f32.mrb[0].mxu0
    %v499 = vadd.f32 0.0, %v498
    %v500 = vpop.f32.mrb[0].mxu0
    %501 = vdwg.mxu0
    %v502 = vadd.f32 %v438, %v496
    %v503 = vadd.f32 %v441, %v499
    %v504 = vsel %vm350, %v502, 0.0
    %v505 = vsel %vm350, %v503, 0.0
    %v506 = vadd.f32 %v504, %v505
    %v507 = vrot.slane %v506, 4
    %v508 = vadd.f32 %v506, %v507
    %v509 = vrot.slane %v508, 2
    %v510 = vadd.f32 %v508, %v509
    %v511 = vrot.slane %v510, 1
    %v512 = vadd.f32 %v510, %v511
    %v513 = vmul.f32 %v502, %v502
    %v514 = vmul.f32 %v503, %v503
    %v515 = vsel %vm350, %v513, 0.0
    %v516 = vsel %vm350, %v514, 0.0
    %v517 = vadd.f32 %v515, %v516
    %v518 = vrot.slane %v517, 4
    %v519 = vadd.f32 %v517, %v518
    %v520 = vrot.slane %v519, 2
    %v521 = vadd.f32 %v519, %v520
    %v522 = vrot.slane %v521, 1
    %v523 = vadd.f32 %v521, %v522
    %vm524 = vcmask 1040384
    %v525 = vsel %vm524, %v512, %v523
    %v526 = vld [vmem:[#allocation7] sm:$0xff]
    %v527 = vld [vmem:[#allocation7 + $0x8] sm:$0xff]
    %v528 = vld [vmem:[#allocation7 + $0x10] sm:$0xff]
    %v529 = vld [vmem:[#allocation7 + $0x18] sm:$0xff]
    %v531 = vsel %vm350, %v525, 0
    %533 = vmatprep.subr.mxu0 0.0
    %534 = vmatpush1.msra.mxu0 %v526
    %535 = vmatprep.subr.mxu0 0.0
    %536 = vmatpush1.msra.mxu0 %v527
    %537 = vmatprep.subr.mxu0 0.0
    %538 = vmatpush1.msra.mxu0 %v528
    %539 = vmatprep.subr.mxu0 0.0
    %540 = vmatpush1.msra.mxu0 %v529
    %541 = vmatprep.subr.mxu0 0.0
    %542 = vmatpush1.msra.mxu0 0.0
    %543 = vmatprep.subr.mxu0 0.0
    %544 = vmatpush1.msra.mxu0 0.0
    %545 = vmatprep.subr.mxu0 0.0
    %546 = vmatpush1.msra.mxu0 0.0
    %547 = vmatprep.subr.mxu0 0.0
    %548 = vmatpush1.msra.mxu0 0.0
    %549 = vmatprep.subr.mxu0 0.0
    %550 = vmatpush1.msra.mxu0 0.0
    %551 = vmatprep.subr.mxu0 0.0
    %552 = vmatpush1.msra.mxu0 0.0
    %553 = vmatprep.subr.mxu0 0.0
    %554 = vmatpush1.msra.mxu0 0.0
    %555 = vmatprep.subr.mxu0 0.0
    %556 = vmatpush1.msra.mxu0 0.0
    %557 = vmatprep.subr.mxu0 0.0
    %558 = vmatpush1.msra.mxu0 0.0
    %559 = vmatprep.subr.mxu0 0.0
    %560 = vmatpush1.msra.mxu0 0.0
    %561 = vmatprep.subr.mxu0 0.0
    %562 = vmatpush1.msra.mxu0 0.0
    %563 = vmatprep.subr.mxu0 0.0
    %564 = vmatpush1.msra.mxu0 0.0
    %565 = vmatprep.subr.mxu0 0.0
    %566 = vmatpush1.msra.mxu0 0.0
    %567 = vmatprep.subr.mxu0 0.0
    %568 = vmatpush1.msra.mxu0 0.0
    %569 = vmatprep.subr.mxu0 0.0
    %570 = vmatpush1.msra.mxu0 0.0
    %571 = vmatprep.subr.mxu0 0.0
    %572 = vmatpush1.msra.mxu0 0.0
    %573 = vmatprep.subr.mxu0 0.0
    %574 = vmatpush1.msra.mxu0 0.0
    %575 = vmatprep.subr.mxu0 0.0
    %576 = vmatpush1.msra.mxu0 0.0
    %577 = vmatprep.subr.mxu0 0.0
    %578 = vmatpush1.msra.mxu0 0.0
    %579 = vmatprep.subr.mxu0 0.0
    %580 = vmatpush1.msra.mxu0 0.0
    %581 = vmatprep.subr.mxu0 0.0
    %582 = vmatpush1.msra.mxu0 0.0
    %583 = vmatprep.subr.mxu0 0.0
    %584 = vmatpush1.msra.mxu0 0.0
    %585 = vmatprep.subr.mxu0 0.0
    %586 = vmatpush1.msra.mxu0 0.0
    %587 = vmatprep.subr.mxu0 0.0
    %588 = vmatpush1.msra.mxu0 0.0
    %589 = vmatprep.subr.mxu0 0.0
    %590 = vmatpush1.msra.mxu0 0.0
    %591 = vmatprep.subr.mxu0 0.0
    %592 = vmatpush1.msra.mxu0 0.0
    %593 = vmatprep.subr.mxu0 0.0
    %594 = vmatpush1.msra.mxu0 0.0
    %595 = vmatprep.subr.mxu0 0.0
    %596 = vmatpush1.msra.mxu0 0.0
    %597 = vmatprep.mubr.f32.mxu0 0.0
    %598 = vmatmul.mubr.f32.gmra.mrb[0].mxu0 %v531
    %v599 = vpop.f32.mrb[0].mxu0
    %v600 = vadd.f32 0.0, %v599
    %v601 = vpop.f32.mrb[0].mxu0
    %602 = vdwg.mxu0
    %v603 = vmul.f32 %v600, 0.0625
    %v604 = vmul.f32 %v603, %v603
    %v606 = vrot.slane %v604, 7
    %v608 = vsub.f32 %v603, %v606
    %v609 = vld [vmem:[#allocation8] sm:$0x1]
    %v610 = vadd.f32 %v608, 1e-05
    %v611 = vrsqrt.pop %v610
    %v614 = vunpack.c.l.s4 1966171168
    %v615 = vunpack.c.0.s8 %v614
    %v616 = vlaneseq
    %v617 = vshrl.u32 %v616, 7
    %v618 = vsub.s32 %v615, %v617
    %v619 = vrot.slane %v611, %v618
    %v620 = vcombine.high %v619, %v619
    %v622 = vunpack.c.l.s4 1966171168
    %v623 = vunpack.c.0.s8 %v622
    %v624 = vlaneseq
    %v625 = vshrl.u32 %v624, 7
    %v626 = vsub.s32 %v623, %v625
    %v627 = vrot.slane %v620, %v626
    %v629 = vmul.f32 %v609, %v627
    %v630 = vld [vmem:[#allocation10] sm:$0x1]
    %v631 = vmul.f32 %v603, %v629
    %v632 = vsub.f32 %v630, %v631
    %v634 = vlaneseq
    %v635 = vshrl.u32 %v634, 7
    %v636 = vsub.s32 0, %v635
    %v637 = vrot.slane %v629, %v636
    %v639 = vmul.f32 %v502, %v637
    %v640 = vmul.f32 %v503, %v637
    %v642 = vlaneseq
    %v643 = vshrl.u32 %v642, 7
    %v644 = vsub.s32 0, %v643
    %v645 = vrot.slane %v632, %v644
    %v647 = vadd.f32 %v639, %v645
    %v648 = vadd.f32 %v640, %v645
    %v649 = vmax.f32 %v647, 0.0
    %v650 = vmax.f32 %v648, 0.0
    %v651 = vpack.c.bf16 %v650, %v649
    %v652 = vld [vmem:[#allocation13] sm:$0xf]
    %v653 = vld [vmem:[#allocation13 + $0x4] sm:$0xf]
    %v654 = vld [vmem:[#allocation13 + $0x8] sm:$0xf]
    %v655 = vld [vmem:[#allocation13 + $0xc] sm:$0xf]
    %v660 = vunpack.c.l.b16 %v652
    %v661 = vunpack.c.l.b16 %v653
    %v662 = vunpack.c.l.b16 %v654
    %v663 = vunpack.c.l.b16 %v655
    %v664 = vpack.c.b16 %v661, %v660
    %v665 = vpack.c.b16 %v663, %v662
    %v669 = vsel %vm350, %v651, 0
    %671 = vmatprep.subr.bf16.mxu0 0
    %672 = vmatpush1.bf16.msra.mxu0 %v664
    %673 = vmatprep.subr.bf16.mxu0 0
    %674 = vmatpush1.bf16.msra.mxu0 %v665
    %675 = vmatprep.subr.bf16.mxu0 0
    %676 = vmatpush1.bf16.msra.mxu0 0
    %677 = vmatprep.subr.bf16.mxu0 0
    %678 = vmatpush1.bf16.msra.mxu0 0
    %679 = vmatprep.subr.bf16.mxu0 0
    %680 = vmatpush1.bf16.msra.mxu0 0
    %681 = vmatprep.subr.bf16.mxu0 0
    %682 = vmatpush1.bf16.msra.mxu0 0
    %683 = vmatprep.subr.bf16.mxu0 0
    %684 = vmatpush1.bf16.msra.mxu0 0
    %685 = vmatprep.subr.bf16.mxu0 0
    %686 = vmatpush1.bf16.msra.mxu0 0
    %687 = vmatprep.subr.bf16.mxu0 0
    %688 = vmatpush1.bf16.msra.mxu0 0
    %689 = vmatprep.subr.bf16.mxu0 0
    %690 = vmatpush1.bf16.msra.mxu0 0
    %691 = vmatprep.subr.bf16.mxu0 0
    %692 = vmatpush1.bf16.msra.mxu0 0
    %693 = vmatprep.subr.bf16.mxu0 0
    %694 = vmatpush1.bf16.msra.mxu0 0
    %695 = vmatprep.subr.bf16.mxu0 0
    %696 = vmatpush1.bf16.msra.mxu0 0
    %697 = vmatprep.subr.bf16.mxu0 0
    %698 = vmatpush1.bf16.msra.mxu0 0
    %699 = vmatprep.subr.bf16.mxu0 0
    %700 = vmatpush1.bf16.msra.mxu0 0
    %701 = vmatprep.subr.bf16.mxu0 0
    %702 = vmatpush1.bf16.msra.mxu0 0
    %703 = vmatprep.mubr.bf16.mxu0 0
    %704 = vmatmul.mubr.bf16.gmra.mrb[0].mxu0 %v669
    %v705 = vpop.f32.mrb[0].mxu0
    %v706 = vadd.f32 0.0, %v705
    %v707 = vpop.f32.mrb[0].mxu0
    %v708 = vpop.f32.mrb[0].mxu0
    %v709 = vadd.f32 0.0, %v708
    %v710 = vpop.f32.mrb[0].mxu0
    %711 = vdwg.mxu0
    %v712 = vpack.c.bf16 %v709, %v706
    %v713 = vld [vmem:[#allocation11] sm:$0xf]
    %s714 = scalar_lea.vmem [#allocation11], 4
    %v715 = vld [vmem:[%s714] sm:$0xf]
    %717 = vrot.lane.b32.xlu0 %v712, 112
    %v718 = vpop.permute.xlu0 %717
    %v721 = vsel %vm274, %v715, 0
    %723 = vmatprep.subr.bf16.mxu0 0
    %724 = vmatpush1.bf16.msra.mxu0 %v718
    %725 = vmatprep.subr.bf16.mxu0 0
    %726 = vmatpush1.bf16.msra.mxu0 0
    %727 = vmatprep.subr.bf16.mxu0 0
    %728 = vmatpush1.bf16.msra.mxu0 0
    %729 = vmatprep.subr.bf16.mxu0 0
    %730 = vmatpush1.bf16.msra.mxu0 0
    %731 = vmatprep.subr.bf16.mxu0 0
    %732 = vmatpush1.bf16.msra.mxu0 0
    %733 = vmatprep.subr.bf16.mxu0 0
    %734 = vmatpush1.bf16.msra.mxu0 0
    %735 = vmatprep.subr.bf16.mxu0 0
    %736 = vmatpush1.bf16.msra.mxu0 0
    %737 = vmatprep.subr.bf16.mxu0 0
    %738 = vmatpush1.bf16.msra.mxu0 0
    %739 = vmatprep.subr.bf16.mxu0 0
    %740 = vmatpush1.bf16.msra.mxu0 0
    %741 = vmatprep.subr.bf16.mxu0 0
    %742 = vmatpush1.bf16.msra.mxu0 0
    %743 = vmatprep.subr.bf16.mxu0 0
    %744 = vmatpush1.bf16.msra.mxu0 0
    %745 = vmatprep.subr.bf16.mxu0 0
    %746 = vmatpush1.bf16.msra.mxu0 0
    %747 = vmatprep.subr.bf16.mxu0 0
    %748 = vmatpush1.bf16.msra.mxu0 0
    %749 = vmatprep.subr.bf16.mxu0 0
    %750 = vmatpush1.bf16.msra.mxu0 0
    %751 = vmatprep.subr.bf16.mxu0 0
    %752 = vmatpush1.bf16.msra.mxu0 0
    %753 = vmatprep.subr.bf16.mxu0 0
    %754 = vmatpush1.bf16.msra.mxu0 0
    %755 = vmatprep.mubr.bf16.mxu0 0
    %756 = vmatmul.mubr.bf16.gmra.mrb[0].mxu0 %v721
    %v757 = vpop.f32.mrb[0].mxu0
    %v758 = vadd.f32 0.0, %v757
    %v759 = vpop.f32.mrb[0].mxu0
    %v760 = vpop.f32.mrb[0].mxu0
    %v761 = vpop.f32.mrb[0].mxu0
    %762 = vdwg.mxu0
    %v764 = vsel %vm274, %v713, 0
    %766 = vmatprep.subr.bf16.mxu0 0
    %767 = vmatpush1.bf16.msra.mxu0 %v712
    %768 = vmatprep.subr.bf16.mxu0 0
    %769 = vmatpush1.bf16.msra.mxu0 0
    %770 = vmatprep.subr.bf16.mxu0 0
    %771 = vmatpush1.bf16.msra.mxu0 0
    %772 = vmatprep.subr.bf16.mxu0 0
    %773 = vmatpush1.bf16.msra.mxu0 0
    %774 = vmatprep.subr.bf16.mxu0 0
    %775 = vmatpush1.bf16.msra.mxu0 0
    %776 = vmatprep.subr.bf16.mxu0 0
    %777 = vmatpush1.bf16.msra.mxu0 0
    %778 = vmatprep.subr.bf16.mxu0 0
    %779 = vmatpush1.bf16.msra.mxu0 0
    %780 = vmatprep.subr.bf16.mxu0 0
    %781 = vmatpush1.bf16.msra.mxu0 0
    %782 = vmatprep.subr.bf16.mxu0 0
    %783 = vmatpush1.bf16.msra.mxu0 0
    %784 = vmatprep.subr.bf16.mxu0 0
    %785 = vmatpush1.bf16.msra.mxu0 0
    %786 = vmatprep.subr.bf16.mxu0 0
    %787 = vmatpush1.bf16.msra.mxu0 0
    %788 = vmatprep.subr.bf16.mxu0 0
    %789 = vmatpush1.bf16.msra.mxu0 0
    %790 = vmatprep.subr.bf16.mxu0 0
    %791 = vmatpush1.bf16.msra.mxu0 0
    %792 = vmatprep.subr.bf16.mxu0 0
    %793 = vmatpush1.bf16.msra.mxu0 0
    %794 = vmatprep.subr.bf16.mxu0 0
    %795 = vmatpush1.bf16.msra.mxu0 0
    %796 = vmatprep.subr.bf16.mxu0 0
    %797 = vmatpush1.bf16.msra.mxu0 0
    %798 = vmatprep.mubr.bf16.mxu0 0
    %799 = vmatmul.mubr.bf16.gmra.mrb[0].mxu0 %v764
    %v800 = vpop.f32.mrb[0].mxu0
    %v801 = vadd.f32 %v758, %v800
    %v802 = vpop.f32.mrb[0].mxu0
    %v803 = vpop.f32.mrb[0].mxu0
    %v804 = vpop.f32.mrb[0].mxu0
    %805 = vdwg.mxu0
    %s806 = scalar_lea.vmem [#allocation11], 8
    %v807 = vld [vmem:[%s806] sm:$0xf]
    %808 = vrot.lane.b32.xlu0 %v712, 96
    %v809 = vpop.permute.xlu0 %808
    %v812 = vsel %vm274, %v807, 0
    %814 = vmatprep.subr.bf16.mxu0 0
    %815 = vmatpush1.bf16.msra.mxu0 %v809
    %816 = vmatprep.subr.bf16.mxu0 0
    %817 = vmatpush1.bf16.msra.mxu0 0
    %818 = vmatprep.subr.bf16.mxu0 0
    %819 = vmatpush1.bf16.msra.mxu0 0
    %820 = vmatprep.subr.bf16.mxu0 0
    %821 = vmatpush1.bf16.msra.mxu0 0
    %822 = vmatprep.subr.bf16.mxu0 0
    %823 = vmatpush1.bf16.msra.mxu0 0
    %824 = vmatprep.subr.bf16.mxu0 0
    %825 = vmatpush1.bf16.msra.mxu0 0
    %826 = vmatprep.subr.bf16.mxu0 0
    %827 = vmatpush1.bf16.msra.mxu0 0
    %828 = vmatprep.subr.bf16.mxu0 0
    %829 = vmatpush1.bf16.msra.mxu0 0
    %830 = vmatprep.subr.bf16.mxu0 0
    %831 = vmatpush1.bf16.msra.mxu0 0
    %832 = vmatprep.subr.bf16.mxu0 0
    %833 = vmatpush1.bf16.msra.mxu0 0
    %834 = vmatprep.subr.bf16.mxu0 0
    %835 = vmatpush1.bf16.msra.mxu0 0
    %836 = vmatprep.subr.bf16.mxu0 0
    %837 = vmatpush1.bf16.msra.mxu0 0
    %838 = vmatprep.subr.bf16.mxu0 0
    %839 = vmatpush1.bf16.msra.mxu0 0
    %840 = vmatprep.subr.bf16.mxu0 0
    %841 = vmatpush1.bf16.msra.mxu0 0
    %842 = vmatprep.subr.bf16.mxu0 0
    %843 = vmatpush1.bf16.msra.mxu0 0
    %844 = vmatprep.subr.bf16.mxu0 0
    %845 = vmatpush1.bf16.msra.mxu0 0
    %846 = vmatprep.mubr.bf16.mxu0 0
    %847 = vmatmul.mubr.bf16.gmra.mrb[0].mxu0 %v812
    %v848 = vpop.f32.mrb[0].mxu0
    %v849 = vadd.f32 0.0, %v848
    %v850 = vpop.f32.mrb[0].mxu0
    %v851 = vpop.f32.mrb[0].mxu0
    %v852 = vpop.f32.mrb[0].mxu0
    %853 = vdwg.mxu0
    %v854 = vadd.f32 %v801, %v849
    %v855 = vsel %vm274, %v854, 0.0
    %v856 = vrot.slane %v855, 4
    %v857 = vadd.f32 %v855, %v856
    %v858 = vrot.slane %v857, 2
    %v859 = vadd.f32 %v857, %v858
    %v860 = vrot.slane %v859, 1
    %v861 = vadd.f32 %v859, %v860
    %v862 = vmul.f32 %v854, %v854
    %v863 = vsel %vm274, %v862, 0.0
    %v864 = vrot.slane %v863, 4
    %v865 = vadd.f32 %v863, %v864
    %v866 = vrot.slane %v865, 2
    %v867 = vadd.f32 %v865, %v866
    %v868 = vrot.slane %v867, 1
    %v869 = vadd.f32 %v867, %v868
    %v870 = vsel %vm524, %v861, %v869
    %v871 = vld [vmem:[#allocation14] sm:$0xff]
    %v872 = vld [vmem:[#allocation14 + $0x8] sm:$0xff]
    %v874 = vsel %vm274, %v870, 0
    %876 = vmatprep.subr.mxu0 0.0
    %877 = vmatpush1.msra.mxu0 %v871
    %878 = vmatprep.subr.mxu0 0.0
    %879 = vmatpush1.msra.mxu0 %v872
    %880 = vmatprep.subr.mxu0 0.0
    %881 = vmatpush1.msra.mxu0 0.0
    %882 = vmatprep.subr.mxu0 0.0
    %883 = vmatpush1.msra.mxu0 0.0
    %884 = vmatprep.subr.mxu0 0.0
    %885 = vmatpush1.msra.mxu0 0.0
    %886 = vmatprep.subr.mxu0 0.0
    %887 = vmatpush1.msra.mxu0 0.0
    %888 = vmatprep.subr.mxu0 0.0
    %889 = vmatpush1.msra.mxu0 0.0
    %890 = vmatprep.subr.mxu0 0.0
    %891 = vmatpush1.msra.mxu0 0.0
    %892 = vmatprep.subr.mxu0 0.0
    %893 = vmatpush1.msra.mxu0 0.0
    %894 = vmatprep.subr.mxu0 0.0
    %895 = vmatpush1.msra.mxu0 0.0
    %896 = vmatprep.subr.mxu0 0.0
    %897 = vmatpush1.msra.mxu0 0.0
    %898 = vmatprep.subr.mxu0 0.0
    %899 = vmatpush1.msra.mxu0 0.0
    %900 = vmatprep.subr.mxu0 0.0
    %901 = vmatpush1.msra.mxu0 0.0
    %902 = vmatprep.subr.mxu0 0.0
    %903 = vmatpush1.msra.mxu0 0.0
    %904 = vmatprep.subr.mxu0 0.0
    %905 = vmatpush1.msra.mxu0 0.0
    %906 = vmatprep.subr.mxu0 0.0
    %907 = vmatpush1.msra.mxu0 0.0
    %908 = vmatprep.subr.mxu0 0.0
    %909 = vmatpush1.msra.mxu0 0.0
    %910 = vmatprep.subr.mxu0 0.0
    %911 = vmatpush1.msra.mxu0 0.0
    %912 = vmatprep.subr.mxu0 0.0
    %913 = vmatpush1.msra.mxu0 0.0
    %914 = vmatprep.subr.mxu0 0.0
    %915 = vmatpush1.msra.mxu0 0.0
    %916 = vmatprep.subr.mxu0 0.0
    %917 = vmatpush1.msra.mxu0 0.0
    %918 = vmatprep.subr.mxu0 0.0
    %919 = vmatpush1.msra.mxu0 0.0
    %920 = vmatprep.subr.mxu0 0.0
    %921 = vmatpush1.msra.mxu0 0.0
    %922 = vmatprep.subr.mxu0 0.0
    %923 = vmatpush1.msra.mxu0 0.0
    %924 = vmatprep.subr.mxu0 0.0
    %925 = vmatpush1.msra.mxu0 0.0
    %926 = vmatprep.subr.mxu0 0.0
    %927 = vmatpush1.msra.mxu0 0.0
    %928 = vmatprep.subr.mxu0 0.0
    %929 = vmatpush1.msra.mxu0 0.0
    %930 = vmatprep.subr.mxu0 0.0
    %931 = vmatpush1.msra.mxu0 0.0
    %932 = vmatprep.subr.mxu0 0.0
    %933 = vmatpush1.msra.mxu0 0.0
    %934 = vmatprep.subr.mxu0 0.0
    %935 = vmatpush1.msra.mxu0 0.0
    %936 = vmatprep.subr.mxu0 0.0
    %937 = vmatpush1.msra.mxu0 0.0
    %938 = vmatprep.subr.mxu0 0.0
    %939 = vmatpush1.msra.mxu0 0.0
    %940 = vmatprep.mubr.f32.mxu0 0.0
    %941 = vmatmul.mubr.f32.gmra.mrb[0].mxu0 %v874
    %v942 = vpop.f32.mrb[0].mxu0
    %v943 = vadd.f32 0.0, %v942
    %v944 = vpop.f32.mrb[0].mxu0
    %945 = vdwg.mxu0
    %v946 = vmul.f32 %v943, 0.125
    %v947 = vmul.f32 %v946, %v946
    %v949 = vrot.slane %v947, 7
    %v951 = vsub.f32 %v946, %v949
    %v952 = vld [vmem:[#allocation16] sm:$0x1]
    %v953 = vadd.f32 %v951, 1e-05
    %v954 = vrsqrt.pop %v953
    %v957 = vunpack.c.l.s4 1966171168
    %v958 = vunpack.c.0.s8 %v957
    %v959 = vlaneseq
    %v960 = vshrl.u32 %v959, 7
    %v961 = vsub.s32 %v958, %v960
    %v962 = vrot.slane %v954, %v961
    %v963 = vcombine.high %v962, %v962
    %v965 = vunpack.c.l.s4 1966171168
    %v966 = vunpack.c.0.s8 %v965
    %v967 = vlaneseq
    %v968 = vshrl.u32 %v967, 7
    %v969 = vsub.s32 %v966, %v968
    %v970 = vrot.slane %v963, %v969
    %v972 = vmul.f32 %v952, %v970
    %v973 = vld [vmem:[#allocation17] sm:$0x1]
    %v974 = vmul.f32 %v946, %v972
    %v975 = vsub.f32 %v973, %v974
    %v977 = vlaneseq
    %v978 = vshrl.u32 %v977, 7
    %v979 = vsub.s32 0, %v978
    %v980 = vrot.slane %v972, %v979
    %v982 = vmul.f32 %v854, %v980
    %v984 = vlaneseq
    %v985 = vshrl.u32 %v984, 7
    %v986 = vsub.s32 0, %v985
    %v987 = vrot.slane %v975, %v986
    %v989 = vadd.f32 %v982, %v987
    %v990 = vmax.f32 %v989, 0.0
    %v991 = vpack.c.bf16 %v990, %v990
    %v992 = vld [vmem:[%s12] sm:$0xf]
    %v993 = vld [vmem:[%s12 + $0x4] sm:$0xf]
    %v996 = vunpack.c.l.b16 %v992
    %v997 = vunpack.c.l.b16 %v993
    %v998 = vpack.c.b16 %v997, %v996
    %v1001 = vsel %vm274, %v991, 0
    %1003 = vmatprep.subr.bf16.mxu0 0
    %1004 = vmatpush1.bf16.msra.mxu0 %v998
    %1005 = vmatprep.subr.bf16.mxu0 0
    %1006 = vmatpush1.bf16.msra.mxu0 0
    %1007 = vmatprep.subr.bf16.mxu0 0
    %1008 = vmatpush1.bf16.msra.mxu0 0
    %1009 = vmatprep.subr.bf16.mxu0 0
    %1010 = vmatpush1.bf16.msra.mxu0 0
    %1011 = vmatprep.subr.bf16.mxu0 0
    %1012 = vmatpush1.bf16.msra.mxu0 0
    %1013 = vmatprep.subr.bf16.mxu0 0
    %1014 = vmatpush1.bf16.msra.mxu0 0
    %1015 = vmatprep.subr.bf16.mxu0 0
    %1016 = vmatpush1.bf16.msra.mxu0 0
    %1017 = vmatprep.subr.bf16.mxu0 0
    %1018 = vmatpush1.bf16.msra.mxu0 0
    %1019 = vmatprep.subr.bf16.mxu0 0
    %1020 = vmatpush1.bf16.msra.mxu0 0
    %1021 = vmatprep.subr.bf16.mxu0 0
    %1022 = vmatpush1.bf16.msra.mxu0 0
    %1023 = vmatprep.subr.bf16.mxu0 0
    %1024 = vmatpush1.bf16.msra.mxu0 0
    %1025 = vmatprep.subr.bf16.mxu0 0
    %1026 = vmatpush1.bf16.msra.mxu0 0
    %1027 = vmatprep.subr.bf16.mxu0 0
    %1028 = vmatpush1.bf16.msra.mxu0 0
    %1029 = vmatprep.subr.bf16.mxu0 0
    %1030 = vmatpush1.bf16.msra.mxu0 0
    %1031 = vmatprep.subr.bf16.mxu0 0
    %1032 = vmatpush1.bf16.msra.mxu0 0
    %1033 = vmatprep.subr.bf16.mxu0 0
    %1034 = vmatpush1.bf16.msra.mxu0 0
    %1035 = vmatprep.mubr.bf16.mxu0 0
    %1036 = vmatmul.mubr.bf16.gmra.mrb[0].mxu0 %v1001
    %v1037 = vpop.f32.mrb[0].mxu0
    %v1038 = vadd.f32 0.0, %v1037
    %v1039 = vpop.f32.mrb[0].mxu0
    %v1040 = vpop.f32.mrb[0].mxu0
    %v1041 = vpop.f32.mrb[0].mxu0
    %1042 = vdwg.mxu0
    %v1043 = vpack.c.bf16 %v1038, %v1038
    %v1044 = vld [vmem:[%s11] sm:$0x3]
    %s1045 = scalar_lea.vmem %s11, 2
    %v1046 = vld [vmem:[%s1045] sm:$0x3]
    %1048 = vrot.lane.b32.xlu0 %v1043, 112
    %v1049 = vpop.permute.xlu0 %1048
    %vm1050 = vcmask 64512
    %v1052 = vsel %vm1050, %v1046, 0
    %vm1054 = vcmask 1043456
    %v1056 = vsel %vm1054, %v1049, 0
    %1058 = vmatprep.subr.bf16.mxu0 0
    %1059 = vmatpush1.bf16.msra.mxu0 %v1056
    %1060 = vmatprep.subr.bf16.mxu0 0
    %1061 = vmatpush1.bf16.msra.mxu0 0
    %1062 = vmatprep.subr.bf16.mxu0 0
    %1063 = vmatpush1.bf16.msra.mxu0 0
    %1064 = vmatprep.subr.bf16.mxu0 0
    %1065 = vmatpush1.bf16.msra.mxu0 0
    %1066 = vmatprep.subr.bf16.mxu0 0
    %1067 = vmatpush1.bf16.msra.mxu0 0
    %1068 = vmatprep.subr.bf16.mxu0 0
    %1069 = vmatpush1.bf16.msra.mxu0 0
    %1070 = vmatprep.subr.bf16.mxu0 0
    %1071 = vmatpush1.bf16.msra.mxu0 0
    %1072 = vmatprep.subr.bf16.mxu0 0
    %1073 = vmatpush1.bf16.msra.mxu0 0
    %1074 = vmatprep.subr.bf16.mxu0 0
    %1075 = vmatpush1.bf16.msra.mxu0 0
    %1076 = vmatprep.subr.bf16.mxu0 0
    %1077 = vmatpush1.bf16.msra.mxu0 0
    %1078 = vmatprep.subr.bf16.mxu0 0
    %1079 = vmatpush1.bf16.msra.mxu0 0
    %1080 = vmatprep.subr.bf16.mxu0 0
    %1081 = vmatpush1.bf16.msra.mxu0 0
    %1082 = vmatprep.subr.bf16.mxu0 0
    %1083 = vmatpush1.bf16.msra.mxu0 0
    %1084 = vmatprep.subr.bf16.mxu0 0
    %1085 = vmatpush1.bf16.msra.mxu0 0
    %1086 = vmatprep.subr.bf16.mxu0 0
    %1087 = vmatpush1.bf16.msra.mxu0 0
    %1088 = vmatprep.subr.bf16.mxu0 0
    %1089 = vmatpush1.bf16.msra.mxu0 0
    %1090 = vmatprep.mubr.bf16.mxu0 0
    %1091 = vmatmul.mubr.bf16.gmra.mrb[0].mxu0 %v1052
    %v1092 = vpop.f32.mrb[0].mxu0
    %v1093 = vadd.f32 0.0, %v1092
    %v1094 = vpop.f32.mrb[0].mxu0
    %v1095 = vpop.f32.mrb[0].mxu0
    %v1096 = vpop.f32.mrb[0].mxu0
    %1097 = vdwg.mxu0
    %v1099 = vsel %vm1050, %v1044, 0
    %v1102 = vsel %vm1054, %v1043, 0
    %1104 = vmatprep.subr.bf16.mxu0 0
    %1105 = vmatpush1.bf16.msra.mxu0 %v1102
    %1106 = vmatprep.subr.bf16.mxu0 0
    %1107 = vmatpush1.bf16.msra.mxu0 0
    %1108 = vmatprep.subr.bf16.mxu0 0
    %1109 = vmatpush1.bf16.msra.mxu0 0
    %1110 = vmatprep.subr.bf16.mxu0 0
    %1111 = vmatpush1.bf16.msra.mxu0 0
    %1112 = vmatprep.subr.bf16.mxu0 0
    %1113 = vmatpush1.bf16.msra.mxu0 0
    %1114 = vmatprep.subr.bf16.mxu0 0
    %1115 = vmatpush1.bf16.msra.mxu0 0
    %1116 = vmatprep.subr.bf16.mxu0 0
    %1117 = vmatpush1.bf16.msra.mxu0 0
    %1118 = vmatprep.subr.bf16.mxu0 0
    %1119 = vmatpush1.bf16.msra.mxu0 0
    %1120 = vmatprep.subr.bf16.mxu0 0
    %1121 = vmatpush1.bf16.msra.mxu0 0
    %1122 = vmatprep.subr.bf16.mxu0 0
    %1123 = vmatpush1.bf16.msra.mxu0 0
    %1124 = vmatprep.subr.bf16.mxu0 0
    %1125 = vmatpush1.bf16.msra.mxu0 0
    %1126 = vmatprep.subr.bf16.mxu0 0
    %1127 = vmatpush1.bf16.msra.mxu0 0
    %1128 = vmatprep.subr.bf16.mxu0 0
    %1129 = vmatpush1.bf16.msra.mxu0 0
    %1130 = vmatprep.subr.bf16.mxu0 0
    %1131 = vmatpush1.bf16.msra.mxu0 0
    %1132 = vmatprep.subr.bf16.mxu0 0
    %1133 = vmatpush1.bf16.msra.mxu0 0
    %1134 = vmatprep.subr.bf16.mxu0 0
    %1135 = vmatpush1.bf16.msra.mxu0 0
    %1136 = vmatprep.mubr.bf16.mxu0 0
    %1137 = vmatmul.mubr.bf16.gmra.mrb[0].mxu0 %v1099
    %v1138 = vpop.f32.mrb[0].mxu0
    %v1139 = vadd.f32 %v1093, %v1138
    %v1140 = vpop.f32.mrb[0].mxu0
    %v1141 = vpop.f32.mrb[0].mxu0
    %v1142 = vpop.f32.mrb[0].mxu0
    %1143 = vdwg.mxu0
    %s1144 = scalar_lea.vmem %s11, 4
    %v1145 = vld [vmem:[%s1144] sm:$0x3]
    %1146 = vrot.lane.b32.xlu0 %v1043, 96
    %v1147 = vpop.permute.xlu0 %1146
    %v1149 = vsel %vm1050, %v1145, 0
    %v1152 = vsel %vm1054, %v1147, 0
    %1154 = vmatprep.subr.bf16.mxu0 0
    %1155 = vmatpush1.bf16.msra.mxu0 %v1152
    %1156 = vmatprep.subr.bf16.mxu0 0
    %1157 = vmatpush1.bf16.msra.mxu0 0
    %1158 = vmatprep.subr.bf16.mxu0 0
    %1159 = vmatpush1.bf16.msra.mxu0 0
    %1160 = vmatprep.subr.bf16.mxu0 0
    %1161 = vmatpush1.bf16.msra.mxu0 0
    %1162 = vmatprep.subr.bf16.mxu0 0
    %1163 = vmatpush1.bf16.msra.mxu0 0
    %1164 = vmatprep.subr.bf16.mxu0 0
    %1165 = vmatpush1.bf16.msra.mxu0 0
    %1166 = vmatprep.subr.bf16.mxu0 0
    %1167 = vmatpush1.bf16.msra.mxu0 0
    %1168 = vmatprep.subr.bf16.mxu0 0
    %1169 = vmatpush1.bf16.msra.mxu0 0
    %1170 = vmatprep.subr.bf16.mxu0 0
    %1171 = vmatpush1.bf16.msra.mxu0 0
    %1172 = vmatprep.subr.bf16.mxu0 0
    %1173 = vmatpush1.bf16.msra.mxu0 0
    %1174 = vmatprep.subr.bf16.mxu0 0
    %1175 = vmatpush1.bf16.msra.mxu0 0
    %1176 = vmatprep.subr.bf16.mxu0 0
    %1177 = vmatpush1.bf16.msra.mxu0 0
    %1178 = vmatprep.subr.bf16.mxu0 0
    %1179 = vmatpush1.bf16.msra.mxu0 0
    %1180 = vmatprep.subr.bf16.mxu0 0
    %1181 = vmatpush1.bf16.msra.mxu0 0
    %1182 = vmatprep.subr.bf16.mxu0 0
    %1183 = vmatpush1.bf16.msra.mxu0 0
    %1184 = vmatprep.subr.bf16.mxu0 0
    %1185 = vmatpush1.bf16.msra.mxu0 0
    %1186 = vmatprep.mubr.bf16.mxu0 0
    %1187 = vmatmul.mubr.bf16.gmra.mrb[0].mxu0 %v1149
    %v1188 = vpop.f32.mrb[0].mxu0
    %v1189 = vadd.f32 0.0, %v1188
    %v1190 = vpop.f32.mrb[0].mxu0
    %v1191 = vpop.f32.mrb[0].mxu0
    %v1192 = vpop.f32.mrb[0].mxu0
    %1193 = vdwg.mxu0
    %v1194 = vadd.f32 %v1139, %v1189
    %vm1195 = vcmask 125952
    %v1196 = vsel %vm1195, %v1194, 0.0
    %v1197 = vrot.slane %v1196, 4
    %v1198 = vadd.f32 %v1196, %v1197
    %v1199 = vrot.slane %v1198, 2
    %v1200 = vadd.f32 %v1198, %v1199
    %v1201 = vrot.slane %v1200, 1
    %v1202 = vadd.f32 %v1200, %v1201
    %v1203 = vmul.f32 %v1194, %v1194
    %v1204 = vsel %vm1195, %v1203, 0.0
    %v1205 = vrot.slane %v1204, 4
    %v1206 = vadd.f32 %v1204, %v1205
    %v1207 = vrot.slane %v1206, 2
    %v1208 = vadd.f32 %v1206, %v1207
    %v1209 = vrot.slane %v1208, 1
    %v1210 = vadd.f32 %v1208, %v1209
    %v1211 = vsel %vm524, %v1202, %v1210
    %v1212 = vld [vmem:[#allocation19] sm:$0xff]
    %v1213 = vld [vmem:[#allocation19 + $0x8] sm:$0xff]
    %v1215 = vsel %vm274, %v1211, 0
    %1217 = vmatprep.subr.mxu0 0.0
    %1218 = vmatpush1.msra.mxu0 %v1212
    %1219 = vmatprep.subr.mxu0 0.0
    %1220 = vmatpush1.msra.mxu0 %v1213
    %1221 = vmatprep.subr.mxu0 0.0
    %1222 = vmatpush1.msra.mxu0 0.0
    %1223 = vmatprep.subr.mxu0 0.0
    %1224 = vmatpush1.msra.mxu0 0.0
    %1225 = vmatprep.subr.mxu0 0.0
    %1226 = vmatpush1.msra.mxu0 0.0
    %1227 = vmatprep.subr.mxu0 0.0
    %1228 = vmatpush1.msra.mxu0 0.0
    %1229 = vmatprep.subr.mxu0 0.0
    %1230 = vmatpush1.msra.mxu0 0.0
    %1231 = vmatprep.subr.mxu0 0.0
    %1232 = vmatpush1.msra.mxu0 0.0
    %1233 = vmatprep.subr.mxu0 0.0
    %1234 = vmatpush1.msra.mxu0 0.0
    %1235 = vmatprep.subr.mxu0 0.0
    %1236 = vmatpush1.msra.mxu0 0.0
    %1237 = vmatprep.subr.mxu0 0.0
    %1238 = vmatpush1.msra.mxu0 0.0
    %1239 = vmatprep.subr.mxu0 0.0
    %1240 = vmatpush1.msra.mxu0 0.0
    %1241 = vmatprep.subr.mxu0 0.0
    %1242 = vmatpush1.msra.mxu0 0.0
    %1243 = vmatprep.subr.mxu0 0.0
    %1244 = vmatpush1.msra.mxu0 0.0
    %1245 = vmatprep.subr.mxu0 0.0
    %1246 = vmatpush1.msra.mxu0 0.0
    %1247 = vmatprep.subr.mxu0 0.0
    %1248 = vmatpush1.msra.mxu0 0.0
    %1249 = vmatprep.subr.mxu0 0.0
    %1250 = vmatpush1.msra.mxu0 0.0
    %1251 = vmatprep.subr.mxu0 0.0
    %1252 = vmatpush1.msra.mxu0 0.0
    %1253 = vmatprep.subr.mxu0 0.0
    %1254 = vmatpush1.msra.mxu0 0.0
    %1255 = vmatprep.subr.mxu0 0.0
    %1256 = vmatpush1.msra.mxu0 0.0
    %1257 = vmatprep.subr.mxu0 0.0
    %1258 = vmatpush1.msra.mxu0 0.0
    %1259 = vmatprep.subr.mxu0 0.0
    %1260 = vmatpush1.msra.mxu0 0.0
    %1261 = vmatprep.subr.mxu0 0.0
    %1262 = vmatpush1.msra.mxu0 0.0
    %1263 = vmatprep.subr.mxu0 0.0
    %1264 = vmatpush1.msra.mxu0 0.0
    %1265 = vmatprep.subr.mxu0 0.0
    %1266 = vmatpush1.msra.mxu0 0.0
    %1267 = vmatprep.subr.mxu0 0.0
    %1268 = vmatpush1.msra.mxu0 0.0
    %1269 = vmatprep.subr.mxu0 0.0
    %1270 = vmatpush1.msra.mxu0 0.0
    %1271 = vmatprep.subr.mxu0 0.0
    %1272 = vmatpush1.msra.mxu0 0.0
    %1273 = vmatprep.subr.mxu0 0.0
    %1274 = vmatpush1.msra.mxu0 0.0
    %1275 = vmatprep.subr.mxu0 0.0
    %1276 = vmatpush1.msra.mxu0 0.0
    %1277 = vmatprep.subr.mxu0 0.0
    %1278 = vmatpush1.msra.mxu0 0.0
    %1279 = vmatprep.subr.mxu0 0.0
    %1280 = vmatpush1.msra.mxu0 0.0
    %1281 = vmatprep.mubr.f32.mxu0 0.0
    %1282 = vmatmul.mubr.f32.gmra.mrb[0].mxu0 %v1215
    %v1283 = vpop.f32.mrb[0].mxu0
    %v1284 = vadd.f32 0.0, %v1283
    %v1285 = vpop.f32.mrb[0].mxu0
    %1286 = vdwg.mxu0
    %v1287 = vmul.f32 %v1284, 0.25
    %v1288 = vmul.f32 %v1287, %v1287
    %v1290 = vrot.slane %v1288, 7
    %v1292 = vsub.f32 %v1287, %v1290
    %v1293 = vld [vmem:[%s14] sm:$0x1]
    %v1294 = vadd.f32 %v1292, 1e-05
    %v1295 = vrsqrt.pop %v1294
    %v1298 = vunpack.c.l.s4 1966171168
    %v1299 = vunpack.c.0.s8 %v1298
    %v1300 = vlaneseq
    %v1301 = vshrl.u32 %v1300, 7
    %v1302 = vsub.s32 %v1299, %v1301
    %v1303 = vrot.slane %v1295, %v1302
    %v1304 = vcombine.high %v1303, %v1303
    %v1306 = vunpack.c.l.s4 1966171168
    %v1307 = vunpack.c.0.s8 %v1306
    %v1308 = vlaneseq
    %v1309 = vshrl.u32 %v1308, 7
    %v1310 = vsub.s32 %v1307, %v1309
    %v1311 = vrot.slane %v1304, %v1310
    %v1313 = vmul.f32 %v1293, %v1311
    %v1314 = vld [vmem:[#allocation20] sm:$0x1]
    %v1315 = vmul.f32 %v1287, %v1313
    %v1316 = vsub.f32 %v1314, %v1315
    %v1318 = vlaneseq
    %v1319 = vshrl.u32 %v1318, 7
    %v1320 = vsub.s32 0, %v1319
    %v1321 = vrot.slane %v1313, %v1320
    %v1323 = vmul.f32 %v1194, %v1321
    %v1325 = vlaneseq
    %v1326 = vshrl.u32 %v1325, 7
    %v1327 = vsub.s32 0, %v1326
    %v1328 = vrot.slane %v1316, %v1327
    %v1330 = vadd.f32 %v1323, %v1328
    %v1331 = vmax.f32 %v1330, 0.0
    %v1332 = vpack.c.bf16 %v1331, %v1331
    %v1333 = vld [vmem:[%s16] sm:$0xf]
    %v1334 = vld [vmem:[%s16 + $0x4] sm:$0xf]
    %v1335 = vld [vmem:[#allocation23] sm:$0x1]
    %v1337 = vlaneseq
    %v1338 = vshrl.u32 %v1337, 7
    %v1339 = vsub.s32 0, %v1338
    %v1340 = vrot.slane %v1335, %v1339
    %v1344 = vunpack.c.l.b16 %v1333
    %v1345 = vunpack.c.l.b16 %v1334
    %v1346 = vpack.c.b16 %v1345, %v1344
    %v1349 = vsel %vm274, %v1332, 0
    %1351 = vmatprep.subr.bf16.mxu0 0
    %1352 = vmatpush1.bf16.msra.mxu0 %v1346
    %1353 = vmatprep.subr.bf16.mxu0 0
    %1354 = vmatpush1.bf16.msra.mxu0 0
    %1355 = vmatprep.subr.bf16.mxu0 0
    %1356 = vmatpush1.bf16.msra.mxu0 0
    %1357 = vmatprep.subr.bf16.mxu0 0
    %1358 = vmatpush1.bf16.msra.mxu0 0
    %1359 = vmatprep.subr.bf16.mxu0 0
    %1360 = vmatpush1.bf16.msra.mxu0 0
    %1361 = vmatprep.subr.bf16.mxu0 0
    %1362 = vmatpush1.bf16.msra.mxu0 0
    %1363 = vmatprep.subr.bf16.mxu0 0
    %1364 = vmatpush1.bf16.msra.mxu0 0
    %1365 = vmatprep.subr.bf16.mxu0 0
    %1366 = vmatpush1.bf16.msra.mxu0 0
    %1367 = vmatprep.subr.bf16.mxu0 0
    %1368 = vmatpush1.bf16.msra.mxu0 0
    %1369 = vmatprep.subr.bf16.mxu0 0
    %1370 = vmatpush1.bf16.msra.mxu0 0
    %1371 = vmatprep.subr.bf16.mxu0 0
    %1372 = vmatpush1.bf16.msra.mxu0 0
    %1373 = vmatprep.subr.bf16.mxu0 0
    %1374 = vmatpush1.bf16.msra.mxu0 0
    %1375 = vmatprep.subr.bf16.mxu0 0
    %1376 = vmatpush1.bf16.msra.mxu0 0
    %1377 = vmatprep.subr.bf16.mxu0 0
    %1378 = vmatpush1.bf16.msra.mxu0 0
    %1379 = vmatprep.subr.bf16.mxu0 0
    %1380 = vmatpush1.bf16.msra.mxu0 0
    %1381 = vmatprep.subr.bf16.mxu0 0
    %1382 = vmatpush1.bf16.msra.mxu0 0
    %1383 = vmatprep.mubr.bf16.mxu0 0
    %1384 = vmatmul.mubr.bf16.gmra.mrb[0].mxu0 %v1349
    %v1385 = vpop.f32.mrb[0].mxu0
    %v1386 = vadd.f32 %v1340, %v1385
    %v1387 = vpop.f32.mrb[0].mxu0
    %v1388 = vpop.f32.mrb[0].mxu0
    %v1389 = vpop.f32.mrb[0].mxu0
    %1390 = vdwg.mxu0
    %s1391 = scalar_lea.vmem %s16, 8
    %v1392 = vld [vmem:[%s1391] sm:$0xf]
    %v1393 = vld [vmem:[%s1391 + $0x4] sm:$0xf]
    %s1394 = scalar_lea.vmem [#allocation23], 1
    %v1395 = vld [vmem:[%s1394] sm:$0x1]
    %v1397 = vlaneseq
    %v1398 = vshrl.u32 %v1397, 7
    %v1399 = vsub.s32 0, %v1398
    %v1400 = vrot.slane %v1395, %v1399
    %v1404 = vunpack.c.l.b16 %v1392
    %v1405 = vunpack.c.l.b16 %v1393
    %v1406 = vpack.c.b16 %v1405, %v1404
    %1408 = vmatprep.subr.bf16.mxu0 0
    %1409 = vmatpush1.bf16.msra.mxu0 %v1406
    %1410 = vmatprep.subr.bf16.mxu0 0
    %1411 = vmatpush1.bf16.msra.mxu0 0
    %1412 = vmatprep.subr.bf16.mxu0 0
    %1413 = vmatpush1.bf16.msra.mxu0 0
    %1414 = vmatprep.subr.bf16.mxu0 0
    %1415 = vmatpush1.bf16.msra.mxu0 0
    %1416 = vmatprep.subr.bf16.mxu0 0
    %1417 = vmatpush1.bf16.msra.mxu0 0
    %1418 = vmatprep.subr.bf16.mxu0 0
    %1419 = vmatpush1.bf16.msra.mxu0 0
    %1420 = vmatprep.subr.bf16.mxu0 0
    %1421 = vmatpush1.bf16.msra.mxu0 0
    %1422 = vmatprep.subr.bf16.mxu0 0
    %1423 = vmatpush1.bf16.msra.mxu0 0
    %1424 = vmatprep.subr.bf16.mxu0 0
    %1425 = vmatpush1.bf16.msra.mxu0 0
    %1426 = vmatprep.subr.bf16.mxu0 0
    %1427 = vmatpush1.bf16.msra.mxu0 0
    %1428 = vmatprep.subr.bf16.mxu0 0
    %1429 = vmatpush1.bf16.msra.mxu0 0
    %1430 = vmatprep.subr.bf16.mxu0 0
    %1431 = vmatpush1.bf16.msra.mxu0 0
    %1432 = vmatprep.subr.bf16.mxu0 0
    %1433 = vmatpush1.bf16.msra.mxu0 0
    %1434 = vmatprep.subr.bf16.mxu0 0
    %1435 = vmatpush1.bf16.msra.mxu0 0
    %1436 = vmatprep.subr.bf16.mxu0 0
    %1437 = vmatpush1.bf16.msra.mxu0 0
    %1438 = vmatprep.subr.bf16.mxu0 0
    %1439 = vmatpush1.bf16.msra.mxu0 0
    %1440 = vmatprep.mubr.bf16.mxu0 0
    %1441 = vmatmul.mubr.bf16.gmra.mrb[0].mxu0 %v1349
    %v1442 = vpop.f32.mrb[0].mxu0
    %v1443 = vadd.f32 %v1400, %v1442
    %v1444 = vpop.f32.mrb[0].mxu0
    %v1445 = vpop.f32.mrb[0].mxu0
    %v1446 = vpop.f32.mrb[0].mxu0
    %1447 = vdwg.mxu0
    %s1448 = scalar_lea.vmem %s16, 16
    %v1449 = vld [vmem:[%s1448] sm:$0xf]
    %v1450 = vld [vmem:[%s1448 + $0x4] sm:$0xf]
    %s1451 = scalar_lea.vmem [#allocation23], 2
    %v1452 = vld [vmem:[%s1451] sm:$0x1]
    %v1454 = vlaneseq
    %v1455 = vshrl.u32 %v1454, 7
    %v1456 = vsub.s32 0, %v1455
    %v1457 = vrot.slane %v1452, %v1456
    %v1461 = vunpack.c.l.b16 %v1449
    %v1462 = vunpack.c.l.b16 %v1450
    %v1463 = vpack.c.b16 %v1462, %v1461
    %1465 = vmatprep.subr.bf16.mxu0 0
    %1466 = vmatpush1.bf16.msra.mxu0 %v1463
    %1467 = vmatprep.subr.bf16.mxu0 0
    %1468 = vmatpush1.bf16.msra.mxu0 0
    %1469 = vmatprep.subr.bf16.mxu0 0
    %1470 = vmatpush1.bf16.msra.mxu0 0
    %1471 = vmatprep.subr.bf16.mxu0 0
    %1472 = vmatpush1.bf16.msra.mxu0 0
    %1473 = vmatprep.subr.bf16.mxu0 0
    %1474 = vmatpush1.bf16.msra.mxu0 0
    %1475 = vmatprep.subr.bf16.mxu0 0
    %1476 = vmatpush1.bf16.msra.mxu0 0
    %1477 = vmatprep.subr.bf16.mxu0 0
    %1478 = vmatpush1.bf16.msra.mxu0 0
    %1479 = vmatprep.subr.bf16.mxu0 0
    %1480 = vmatpush1.bf16.msra.mxu0 0
    %1481 = vmatprep.subr.bf16.mxu0 0
    %1482 = vmatpush1.bf16.msra.mxu0 0
    %1483 = vmatprep.subr.bf16.mxu0 0
    %1484 = vmatpush1.bf16.msra.mxu0 0
    %1485 = vmatprep.subr.bf16.mxu0 0
    %1486 = vmatpush1.bf16.msra.mxu0 0
    %1487 = vmatprep.subr.bf16.mxu0 0
    %1488 = vmatpush1.bf16.msra.mxu0 0
    %1489 = vmatprep.subr.bf16.mxu0 0
    %1490 = vmatpush1.bf16.msra.mxu0 0
    %1491 = vmatprep.subr.bf16.mxu0 0
    %1492 = vmatpush1.bf16.msra.mxu0 0
    %1493 = vmatprep.subr.bf16.mxu0 0
    %1494 = vmatpush1.bf16.msra.mxu0 0
    %1495 = vmatprep.subr.bf16.mxu0 0
    %1496 = vmatpush1.bf16.msra.mxu0 0
    %1497 = vmatprep.mubr.bf16.mxu0 0
    %1498 = vmatmul.mubr.bf16.gmra.mrb[0].mxu0 %v1349
    %v1499 = vpop.f32.mrb[0].mxu0
    %v1500 = vadd.f32 %v1457, %v1499
    %v1501 = vpop.f32.mrb[0].mxu0
    %v1502 = vpop.f32.mrb[0].mxu0
    %v1503 = vpop.f32.mrb[0].mxu0
    %1504 = vdwg.mxu0
    %v1505 = vld [vmem:[#allocation22] sm:$0xf]
    %v1506 = vld [vmem:[#allocation22 + $0x4] sm:$0xf]
    %v1507 = vld [vmem:[#allocation25] sm:$0x1]
    %v1509 = vlaneseq
    %v1510 = vshrl.u32 %v1509, 7
    %v1511 = vsub.s32 0, %v1510
    %v1512 = vrot.slane %v1507, %v1511
    %v1516 = vunpack.c.l.b16 %v1505
    %v1517 = vunpack.c.l.b16 %v1506
    %v1518 = vpack.c.b16 %v1517, %v1516
    %v1521 = vsel %vm274, 0, 0
    %1523 = vmatprep.subr.bf16.mxu0 0
    %1524 = vmatpush1.bf16.msra.mxu0 %v1518
    %1525 = vmatprep.subr.bf16.mxu0 0
    %1526 = vmatpush1.bf16.msra.mxu0 0
    %1527 = vmatprep.subr.bf16.mxu0 0
    %1528 = vmatpush1.bf16.msra.mxu0 0
    %1529 = vmatprep.subr.bf16.mxu0 0
    %1530 = vmatpush1.bf16.msra.mxu0 0
    %1531 = vmatprep.subr.bf16.mxu0 0
    %1532 = vmatpush1.bf16.msra.mxu0 0
    %1533 = vmatprep.subr.bf16.mxu0 0
    %1534 = vmatpush1.bf16.msra.mxu0 0
    %1535 = vmatprep.subr.bf16.mxu0 0
    %1536 = vmatpush1.bf16.msra.mxu0 0
    %1537 = vmatprep.subr.bf16.mxu0 0
    %1538 = vmatpush1.bf16.msra.mxu0 0
    %1539 = vmatprep.subr.bf16.mxu0 0
    %1540 = vmatpush1.bf16.msra.mxu0 0
    %1541 = vmatprep.subr.bf16.mxu0 0
    %1542 = vmatpush1.bf16.msra.mxu0 0
    %1543 = vmatprep.subr.bf16.mxu0 0
    %1544 = vmatpush1.bf16.msra.mxu0 0
    %1545 = vmatprep.subr.bf16.mxu0 0
    %1546 = vmatpush1.bf16.msra.mxu0 0
    %1547 = vmatprep.subr.bf16.mxu0 0
    %1548 = vmatpush1.bf16.msra.mxu0 0
    %1549 = vmatprep.subr.bf16.mxu0 0
    %1550 = vmatpush1.bf16.msra.mxu0 0
    %1551 = vmatprep.subr.bf16.mxu0 0
    %1552 = vmatpush1.bf16.msra.mxu0 0
    %1553 = vmatprep.subr.bf16.mxu0 0
    %1554 = vmatpush1.bf16.msra.mxu0 0
    %1555 = vmatprep.mubr.bf16.mxu0 0
    %1556 = vmatmul.mubr.bf16.gmra.mrb[0].mxu0 %v1521
    %v1557 = vpop.f32.mrb[0].mxu0
    %v1558 = vadd.f32 %v1512, %v1557
    %v1559 = vpop.f32.mrb[0].mxu0
    %v1560 = vpop.f32.mrb[0].mxu0
    %v1561 = vpop.f32.mrb[0].mxu0
    %1562 = vdwg.mxu0
    %s1563 = scalar_lea.vmem [#allocation22], 8
    %v1564 = vld [vmem:[%s1563] sm:$0xf]
    %v1565 = vld [vmem:[%s1563 + $0x4] sm:$0xf]
    %s1566 = scalar_lea.vmem [#allocation25], 1
    %v1567 = vld [vmem:[%s1566] sm:$0x1]
    %v1569 = vlaneseq
    %v1570 = vshrl.u32 %v1569, 7
    %v1571 = vsub.s32 0, %v1570
    %v1572 = vrot.slane %v1567, %v1571
    %v1576 = vunpack.c.l.b16 %v1564
    %v1577 = vunpack.c.l.b16 %v1565
    %v1578 = vpack.c.b16 %v1577, %v1576
    %1580 = vmatprep.subr.bf16.mxu0 0
    %1581 = vmatpush1.bf16.msra.mxu0 %v1578
    %1582 = vmatprep.subr.bf16.mxu0 0
    %1583 = vmatpush1.bf16.msra.mxu0 0
    %1584 = vmatprep.subr.bf16.mxu0 0
    %1585 = vmatpush1.bf16.msra.mxu0 0
    %1586 = vmatprep.subr.bf16.mxu0 0
    %1587 = vmatpush1.bf16.msra.mxu0 0
    %1588 = vmatprep.subr.bf16.mxu0 0
    %1589 = vmatpush1.bf16.msra.mxu0 0
    %1590 = vmatprep.subr.bf16.mxu0 0
    %1591 = vmatpush1.bf16.msra.mxu0 0
    %1592 = vmatprep.subr.bf16.mxu0 0
    %1593 = vmatpush1.bf16.msra.mxu0 0
    %1594 = vmatprep.subr.bf16.mxu0 0
    %1595 = vmatpush1.bf16.msra.mxu0 0
    %1596 = vmatprep.subr.bf16.mxu0 0
    %1597 = vmatpush1.bf16.msra.mxu0 0
    %1598 = vmatprep.subr.bf16.mxu0 0
    %1599 = vmatpush1.bf16.msra.mxu0 0
    %1600 = vmatprep.subr.bf16.mxu0 0
    %1601 = vmatpush1.bf16.msra.mxu0 0
    %1602 = vmatprep.subr.bf16.mxu0 0
    %1603 = vmatpush1.bf16.msra.mxu0 0
    %1604 = vmatprep.subr.bf16.mxu0 0
    %1605 = vmatpush1.bf16.msra.mxu0 0
    %1606 = vmatprep.subr.bf16.mxu0 0
    %1607 = vmatpush1.bf16.msra.mxu0 0
    %1608 = vmatprep.subr.bf16.mxu0 0
    %1609 = vmatpush1.bf16.msra.mxu0 0
    %1610 = vmatprep.subr.bf16.mxu0 0
    %1611 = vmatpush1.bf16.msra.mxu0 0
    %1612 = vmatprep.mubr.bf16.mxu0 0
    %1613 = vmatmul.mubr.bf16.gmra.mrb[0].mxu0 %v1521
    %v1614 = vpop.f32.mrb[0].mxu0
    %v1615 = vadd.f32 %v1572, %v1614
    %v1616 = vpop.f32.mrb[0].mxu0
    %v1617 = vpop.f32.mrb[0].mxu0
    %v1618 = vpop.f32.mrb[0].mxu0
    %1619 = vdwg.mxu0
    %s1620 = scalar_lea.vmem [#allocation22], 16
    %v1621 = vld [vmem:[%s1620] sm:$0xf]
    %v1622 = vld [vmem:[%s1620 + $0x4] sm:$0xf]
    %s1623 = scalar_lea.vmem [#allocation25], 2
    %v1624 = vld [vmem:[%s1623] sm:$0x1]
    %v1626 = vlaneseq
    %v1627 = vshrl.u32 %v1626, 7
    %v1628 = vsub.s32 0, %v1627
    %v1629 = vrot.slane %v1624, %v1628
    %v1633 = vunpack.c.l.b16 %v1621
    %v1634 = vunpack.c.l.b16 %v1622
    %v1635 = vpack.c.b16 %v1634, %v1633
    %1637 = vmatprep.subr.bf16.mxu0 0
    %1638 = vmatpush1.bf16.msra.mxu0 %v1635
    %1639 = vmatprep.subr.bf16.mxu0 0
    %1640 = vmatpush1.bf16.msra.mxu0 0
    %1641 = vmatprep.subr.bf16.mxu0 0
    %1642 = vmatpush1.bf16.msra.mxu0 0
    %1643 = vmatprep.subr.bf16.mxu0 0
    %1644 = vmatpush1.bf16.msra.mxu0 0
    %1645 = vmatprep.subr.bf16.mxu0 0
    %1646 = vmatpush1.bf16.msra.mxu0 0
    %1647 = vmatprep.subr.bf16.mxu0 0
    %1648 = vmatpush1.bf16.msra.mxu0 0
    %1649 = vmatprep.subr.bf16.mxu0 0
    %1650 = vmatpush1.bf16.msra.mxu0 0
    %1651 = vmatprep.subr.bf16.mxu0 0
    %1652 = vmatpush1.bf16.msra.mxu0 0
    %1653 = vmatprep.subr.bf16.mxu0 0
    %1654 = vmatpush1.bf16.msra.mxu0 0
    %1655 = vmatprep.subr.bf16.mxu0 0
    %1656 = vmatpush1.bf16.msra.mxu0 0
    %1657 = vmatprep.subr.bf16.mxu0 0
    %1658 = vmatpush1.bf16.msra.mxu0 0
    %1659 = vmatprep.subr.bf16.mxu0 0
    %1660 = vmatpush1.bf16.msra.mxu0 0
    %1661 = vmatprep.subr.bf16.mxu0 0
    %1662 = vmatpush1.bf16.msra.mxu0 0
    %1663 = vmatprep.subr.bf16.mxu0 0
    %1664 = vmatpush1.bf16.msra.mxu0 0
    %1665 = vmatprep.subr.bf16.mxu0 0
    %1666 = vmatpush1.bf16.msra.mxu0 0
    %1667 = vmatprep.subr.bf16.mxu0 0
    %1668 = vmatpush1.bf16.msra.mxu0 0
    %1669 = vmatprep.mubr.bf16.mxu0 0
    %1670 = vmatmul.mubr.bf16.gmra.mrb[0].mxu0 %v1521
    %v1671 = vpop.f32.mrb[0].mxu0
    %v1672 = vadd.f32 %v1629, %v1671
    %v1673 = vpop.f32.mrb[0].mxu0
    %v1674 = vpop.f32.mrb[0].mxu0
    %v1675 = vpop.f32.mrb[0].mxu0
    %1676 = vdwg.mxu0
    %v1677 = vadd.f32 %v1386, %v1558
    %v1678 = vxor.u32 %v1677, 2147483648
    %v1679 = vmul.f32 %v1678, 1.442695
    %v1680 = vpow.pop %v1679
    %v1681 = vadd.f32 %v1680, 1.0
    %v1682 = vrcp.pop %v1681
    %v1683 = vmul.f32 1.0, %v1682
    %v1684 = vadd.f32 %v1443, %v1615
    %v1685 = vxor.u32 %v1684, 2147483648
    %v1686 = vmul.f32 %v1685, 1.442695
    %v1687 = vpow.pop %v1686
    %v1688 = vadd.f32 %v1687, 1.0
    %v1689 = vrcp.pop %v1688
    %v1690 = vmul.f32 1.0, %v1689
    %v1691 = vmul.f32 %v1683, %v1672
    %v1692 = vadd.f32 %v1500, %v1691
    %v1693 = vtanh.pop %v1692
    %v1694 = vsub.f32 1.0, %v1690
    %v1695 = vmul.f32 %v1694, %v1693
    %v1696 = vmul.f32 %v1690, 0.0
    %v1697 = vadd.f32 %v1695, %v1696
    %v1698 = vpack.c.bf16 %v1697, %v1697
    %v1700 = vsel %vm274, %v1698, 0
    %1702 = vmatprep.subr.bf16.mxu0 0
    %1703 = vmatpush1.bf16.msra.mxu0 %v1518
    %1704 = vmatprep.subr.bf16.mxu0 0
    %1705 = vmatpush1.bf16.msra.mxu0 0
    %1706 = vmatprep.subr.bf16.mxu0 0
    %1707 = vmatpush1.bf16.msra.mxu0 0
    %1708 = vmatprep.subr.bf16.mxu0 0
    %1709 = vmatpush1.bf16.msra.mxu0 0
    %1710 = vmatprep.subr.bf16.mxu0 0
    %1711 = vmatpush1.bf16.msra.mxu0 0
    %1712 = vmatprep.subr.bf16.mxu0 0
    %1713 = vmatpush1.bf16.msra.mxu0 0
    %1714 = vmatprep.subr.bf16.mxu0 0
    %1715 = vmatpush1.bf16.msra.mxu0 0
    %1716 = vmatprep.subr.bf16.mxu0 0
    %1717 = vmatpush1.bf16.msra.mxu0 0
    %1718 = vmatprep.subr.bf16.mxu0 0
    %1719 = vmatpush1.bf16.msra.mxu0 0
    %1720 = vmatprep.subr.bf16.mxu0 0
    %1721 = vmatpush1.bf16.msra.mxu0 0
    %1722 = vmatprep.subr.bf16.mxu0 0
    %1723 = vmatpush1.bf16.msra.mxu0 0
    %1724 = vmatprep.subr.bf16.mxu0 0
    %1725 = vmatpush1.bf16.msra.mxu0 0
    %1726 = vmatprep.subr.bf16.mxu0 0
    %1727 = vmatpush1.bf16.msra.mxu0 0
    %1728 = vmatprep.subr.bf16.mxu0 0
    %1729 = vmatpush1.bf16.msra.mxu0 0
    %1730 = vmatprep.subr.bf16.mxu0 0
    %1731 = vmatpush1.bf16.msra.mxu0 0
    %1732 = vmatprep.subr.bf16.mxu0 0
    %1733 = vmatpush1.bf16.msra.mxu0 0
    %1734 = vmatprep.mubr.bf16.mxu0 0
    %1735 = vmatmul.mubr.bf16.gmra.mrb[0].mxu0 %v1700
    %v1736 = vpop.f32.mrb[0].mxu0
    %v1737 = vadd.f32 %v1512, %v1736
    %v1738 = vpop.f32.mrb[0].mxu0
    %v1739 = vpop.f32.mrb[0].mxu0
    %v1740 = vpop.f32.mrb[0].mxu0
    %1741 = vdwg.mxu0
    %1742 = vmatprep.subr.bf16.mxu0 0
    %1743 = vmatpush1.bf16.msra.mxu0 %v1578
    %1744 = vmatprep.subr.bf16.mxu0 0
    %1745 = vmatpush1.bf16.msra.mxu0 0
    %1746 = vmatprep.subr.bf16.mxu0 0
    %1747 = vmatpush1.bf16.msra.mxu0 0
    %1748 = vmatprep.subr.bf16.mxu0 0
    %1749 = vmatpush1.bf16.msra.mxu0 0
    %1750 = vmatprep.subr.bf16.mxu0 0
    %1751 = vmatpush1.bf16.msra.mxu0 0
    %1752 = vmatprep.subr.bf16.mxu0 0
    %1753 = vmatpush1.bf16.msra.mxu0 0
    %1754 = vmatprep.subr.bf16.mxu0 0
    %1755 = vmatpush1.bf16.msra.mxu0 0
    %1756 = vmatprep.subr.bf16.mxu0 0
    %1757 = vmatpush1.bf16.msra.mxu0 0
    %1758 = vmatprep.subr.bf16.mxu0 0
    %1759 = vmatpush1.bf16.msra.mxu0 0
    %1760 = vmatprep.subr.bf16.mxu0 0
    %1761 = vmatpush1.bf16.msra.mxu0 0
    %1762 = vmatprep.subr.bf16.mxu0 0
    %1763 = vmatpush1.bf16.msra.mxu0 0
    %1764 = vmatprep.subr.bf16.mxu0 0
    %1765 = vmatpush1.bf16.msra.mxu0 0
    %1766 = vmatprep.subr.bf16.mxu0 0
    %1767 = vmatpush1.bf16.msra.mxu0 0
    %1768 = vmatprep.subr.bf16.mxu0 0
    %1769 = vmatpush1.bf16.msra.mxu0 0
    %1770 = vmatprep.subr.bf16.mxu0 0
    %1771 = vmatpush1.bf16.msra.mxu0 0
    %1772 = vmatprep.subr.bf16.mxu0 0
    %1773 = vmatpush1.bf16.msra.mxu0 0
    %1774 = vmatprep.mubr.bf16.mxu0 0
    %1775 = vmatmul.mubr.bf16.gmra.mrb[0].mxu0 %v1700
    %v1776 = vpop.f32.mrb[0].mxu0
    %v1777 = vadd.f32 %v1572, %v1776
    %v1778 = vpop.f32.mrb[0].mxu0
    %v1779 = vpop.f32.mrb[0].mxu0
    %v1780 = vpop.f32.mrb[0].mxu0
    %1781 = vdwg.mxu0
    %1782 = vmatprep.subr.bf16.mxu0 0
    %1783 = vmatpush1.bf16.msra.mxu0 %v1635
    %1784 = vmatprep.subr.bf16.mxu0 0
    %1785 = vmatpush1.bf16.msra.mxu0 0
    %1786 = vmatprep.subr.bf16.mxu0 0
    %1787 = vmatpush1.bf16.msra.mxu0 0
    %1788 = vmatprep.subr.bf16.mxu0 0
    %1789 = vmatpush1.bf16.msra.mxu0 0
    %1790 = vmatprep.subr.bf16.mxu0 0
    %1791 = vmatpush1.bf16.msra.mxu0 0
    %1792 = vmatprep.subr.bf16.mxu0 0
    %1793 = vmatpush1.bf16.msra.mxu0 0
    %1794 = vmatprep.subr.bf16.mxu0 0
    %1795 = vmatpush1.bf16.msra.mxu0 0
    %1796 = vmatprep.subr.bf16.mxu0 0
    %1797 = vmatpush1.bf16.msra.mxu0 0
    %1798 = vmatprep.subr.bf16.mxu0 0
    %1799 = vmatpush1.bf16.msra.mxu0 0
    %1800 = vmatprep.subr.bf16.mxu0 0
    %1801 = vmatpush1.bf16.msra.mxu0 0
    %1802 = vmatprep.subr.bf16.mxu0 0
    %1803 = vmatpush1.bf16.msra.mxu0 0
    %1804 = vmatprep.subr.bf16.mxu0 0
    %1805 = vmatpush1.bf16.msra.mxu0 0
    %1806 = vmatprep.subr.bf16.mxu0 0
    %1807 = vmatpush1.bf16.msra.mxu0 0
    %1808 = vmatprep.subr.bf16.mxu0 0
    %1809 = vmatpush1.bf16.msra.mxu0 0
    %1810 = vmatprep.subr.bf16.mxu0 0
    %1811 = vmatpush1.bf16.msra.mxu0 0
    %1812 = vmatprep.subr.bf16.mxu0 0
    %1813 = vmatpush1.bf16.msra.mxu0 0
    %1814 = vmatprep.mubr.bf16.mxu0 0
    %1815 = vmatmul.mubr.bf16.gmra.mrb[0].mxu0 %v1700
    %v1816 = vpop.f32.mrb[0].mxu0
    %v1817 = vadd.f32 %v1629, %v1816
    %v1818 = vpop.f32.mrb[0].mxu0
    %v1819 = vpop.f32.mrb[0].mxu0
    %v1820 = vpop.f32.mrb[0].mxu0
    %1821 = vdwg.mxu0
    %v1823 = vrot.slane %v1737, 6
    %v1825 = vadd.f32 %v1386, %v1823
    %v1826 = vxor.u32 %v1825, 2147483648
    %v1827 = vmul.f32 %v1826, 1.442695
    %v1828 = vpow.pop %v1827
    %v1829 = vadd.f32 %v1828, 1.0
    %v1830 = vrcp.pop %v1829
    %v1831 = vmul.f32 1.0, %v1830
    %v1833 = vrot.slane %v1777, 6
    %v1835 = vadd.f32 %v1443, %v1833
    %v1836 = vxor.u32 %v1835, 2147483648
    %v1837 = vmul.f32 %v1836, 1.442695
    %v1838 = vpow.pop %v1837
    %v1839 = vadd.f32 %v1838, 1.0
    %v1840 = vrcp.pop %v1839
    %v1841 = vmul.f32 1.0, %v1840
    %v1843 = vrot.slane %v1817, 6
    %v1845 = vmul.f32 %v1831, %v1843
    %v1846 = vadd.f32 %v1500, %v1845
    %v1847 = vtanh.pop %v1846
    %v1848 = vsub.f32 1.0, %v1841
    %v1849 = vmul.f32 %v1848, %v1847
    %v1851 = vrot.slane %v1697, 6
    %v1853 = vmul.f32 %v1841, %v1851
    %v1854 = vadd.f32 %v1849, %v1853
    %vm1855 = vcmask 125954
    %1856 = vst.msk [vmem:[#allocation26 - $0x2] sm:$0xc] %vm1855, %v1854
    // Predicated region
    $region142: #{reference_encoder_forward.1} parent=1 // pred_check
      _
    $region143: #{reference_encoder_forward.1} parent=1 // pred_check_branch
      %1858 = sbr.rel (0) target = $region145
    $region144: #{reference_encoder_forward.1} parent=1 // pred_region
      %s1860 = ssub.s32 32, 32
      %1861 = vsyncadd [#allocation4], %s1860
      %s1863 = sshll.u32 [#allocation26], 4
      %s1864 = int_to_ptr.vmem [resolvable:$true] %s1863
      %1866 = dma.vmem_to_hbm [thread:$0]  %s1864, 32, %s20, [#allocation4]
    $region145: #{reference_encoder_forward.1} parent=1 // pred_fallthru
      _
    // Predicated region
    $region146: #{reference_encoder_forward.1} parent=1 // pred_check
      _
    $region147: #{reference_encoder_forward.1} parent=1 // pred_check_branch
      %1868 = sbr.rel (0) target = $region149
    $region148: #{reference_encoder_forward.1} parent=1 // pred_region
      %1869 = dma.done [#allocation4], 32
    $region149: #{reference_encoder_forward.1} parent=1 // pred_fallthru
      _
    %1870 = vsyncpa [#allocation3], 1
    %1871 = vsyncpa [#allocation6], 1
    %1872 = vsyncpa [#allocation9], 1
    %1873 = vsyncpa [#allocation12], 1
    %1874 = vsyncpa [#allocation15], 1
    %1875 = vsyncpa [#allocation18], 1
    %1876 = vsyncpa [#allocation21], 1
    %1877 = vsyncpa [#allocation24], 1
    %1878 = vsyncpa [#allocation4], 1

</llo_original>
